<compile_context>
chip_gen: v6e
topology: v6e:2x2x1
jax: 0.10.0
libtpu: 0.0.40
codegen_flags: <defaults>
</compile_context>

<pallas_src>
import jax
import jax.numpy as jnp
from jax.experimental import pallas as pl
from jax.experimental.pallas import tpu as pltpu


def _round_up(x, m):
    return (x + m - 1) // m * m


# ---------------------------------------------------------------------------
# Pallas kernels
# ---------------------------------------------------------------------------
def _conv_pool_kernel(p00_ref, p01_ref, p10_ref, p11_ref, w_ref, b_ref, o_ref):
    """Fused conv-as-matmul + bias + 2x2 maxpool.

    Each p_ref holds the im2col patch rows for one of the four 2x2 pooling
    window positions; the pooled conv output is the elementwise max of the
    four (patches @ w + b) results.  Nothing un-pooled ever leaves VMEM.
    (The spec's `features` block has no ReLU, so none is applied here.)
    """
    w = w_ref[...]
    b = b_ref[...]

    def head(p_ref):
        return jnp.dot(p_ref[...], w, preferred_element_type=jnp.float32) + b

    pooled = jnp.maximum(jnp.maximum(head(p00_ref), head(p01_ref)),
                         jnp.maximum(head(p10_ref), head(p11_ref)))
    o_ref[...] = pooled.astype(o_ref.dtype)


def _mlp_kernel(x_ref, w1_ref, b1_ref, w2_ref, b2_ref, w3_ref, b3_ref, o_ref):
    """Fused classifier: Linear -> ReLU -> Linear -> ReLU -> Linear.

    All three weight matrices (~170 KB f32 total) and the (tile_b, 120/84)
    intermediates live entirely in VMEM/vregs; only the final logits hit HBM.
    """
    h = jnp.dot(x_ref[...], w1_ref[...], preferred_element_type=jnp.float32) + b1_ref[...]
    h = jnp.maximum(h, 0.0)
    h = jnp.dot(h, w2_ref[...], preferred_element_type=jnp.float32) + b2_ref[...]
    h = jnp.maximum(h, 0.0)
    o = jnp.dot(h, w3_ref[...], preferred_element_type=jnp.float32) + b3_ref[...]
    o_ref[...] = o.astype(o_ref.dtype)


# ---------------------------------------------------------------------------
# pallas_call wrappers (row-tiled, "parallel" grid)
# ---------------------------------------------------------------------------
def conv_pool_matmul(p4, w, b, *, tile_m=512):
    """p4: four (M, Kp) pool-window patch matrices.  Returns pooled conv (M, N)."""
    M, Kp = p4[0].shape
    N = w.shape[1]
    tm = min(tile_m, _round_up(M, 8))            # multiple of 8 sublanes
    Mp = _round_up(M, tm)
    if Mp != M:
        p4 = [jnp.pad(p, ((0, Mp - M), (0, 0))) for p in p4]
    out = pl.pallas_call(
        _conv_pool_kernel,
        grid=(Mp // tm,),
        in_specs=[pl.BlockSpec((tm, Kp), lambda i: (i, 0)) for _ in range(4)]
        + [
            pl.BlockSpec((Kp, N), lambda i: (0, 0)),
            pl.BlockSpec((1, N), lambda i: (0, 0)),
        ],
        out_specs=pl.BlockSpec((tm, N), lambda i: (i, 0)),
        out_shape=jax.ShapeDtypeStruct((Mp, N), jnp.float32),
        compiler_params=pltpu.CompilerParams(dimension_semantics=("parallel",)),
    )(*p4, w, b)
    return out[:M] if Mp != M else out


def mlp(x, w1, b1, w2, b2, w3, b3, *, tile_b=256):
    B, D = x.shape
    N = w3.shape[1]
    tb = min(tile_b, _round_up(B, 8))
    Bp = _round_up(B, tb)
    if Bp != B:
        x = jnp.pad(x, ((0, Bp - B), (0, 0)))
    out = pl.pallas_call(
        _mlp_kernel,
        grid=(Bp // tb,),
        in_specs=[
            pl.BlockSpec((tb, D), lambda i: (i, 0)),
            pl.BlockSpec(w1.shape, lambda i: (0, 0)),
            pl.BlockSpec(b1.shape, lambda i: (0, 0)),
            pl.BlockSpec(w2.shape, lambda i: (0, 0)),
            pl.BlockSpec(b2.shape, lambda i: (0, 0)),
            pl.BlockSpec(w3.shape, lambda i: (0, 0)),
            pl.BlockSpec(b3.shape, lambda i: (0, 0)),
        ],
        out_specs=pl.BlockSpec((tb, N), lambda i: (i, 0)),
        out_shape=jax.ShapeDtypeStruct((Bp, N), jnp.float32),
        compiler_params=pltpu.CompilerParams(dimension_semantics=("parallel",)),
    )(x, w1, b1, w2, b2, w3, b3)
    return out[:B] if Bp != B else out


# ---------------------------------------------------------------------------
# Plain-JAX glue (index manipulation only, no hot-path compute)
# ---------------------------------------------------------------------------
def _im2col_nhwc(x, k):
    """k x k patches (stride 1, valid); columns in torch (C, kh, kw) flatten order."""
    B, H, W, C = x.shape
    Ho, Wo = H - k + 1, W - k + 1
    rows = jnp.stack([x[:, ki:ki + Ho, :, :] for ki in range(k)], axis=-1)        # (B,Ho,W,C,k)
    cols = jnp.stack([rows[:, :, kj:kj + Wo, :, :] for kj in range(k)], axis=-1)  # (B,Ho,Wo,C,k,k)
    return cols.reshape(B, Ho, Wo, C * k * k)


def _pool_patch_mats(x_nhwc, k, k_pad):
    """im2col, pad K, split into the 4 maxpool(2,2) window-position patch matrices."""
    B, H, W, C = x_nhwc.shape
    Ho, Wo = H - k + 1, W - k + 1
    Hp, Wp = Ho // 2, Wo // 2
    pt = _im2col_nhwc(x_nhwc, k)                                                  # (B,Ho,Wo,C*k*k)
    pt = jnp.pad(pt, ((0, 0), (0, 0), (0, 0), (0, k_pad - C * k * k)))
    mats = [
        pt[:, di:2 * Hp:2, dj:2 * Wp:2, :].reshape(B * Hp * Wp, k_pad)
        for di in (0, 1) for dj in (0, 1)
    ]
    return mats, (Hp, Wp)


def lenet_forward(x_nchw, pp):
    B = x_nchw.shape[0]
    x = jnp.transpose(x_nchw, (0, 2, 3, 1))                        # NCHW -> NHWC

    # Conv1(1->6, 5x5) + MaxPool(2,2): one fused Pallas call.
    pools, (Hp, Wp) = _pool_patch_mats(x, 5, pp["w1m"].shape[0])
    h1 = conv_pool_matmul(pools, pp["w1m"], pp["b1"]).reshape(B, Hp, Wp, 6)

    # Conv2(6->16, 5x5) + MaxPool(2,2): one fused Pallas call.
    pools, (Hp, Wp) = _pool_patch_mats(h1, 5, pp["w2m"].shape[0])
    h2 = conv_pool_matmul(pools, pp["w2m"], pp["b2"]).reshape(B, Hp, Wp, 16)

    # Flatten exactly like torch's x.view(-1, 16*4*4): (C, H, W) order.
    flat = jnp.transpose(h2, (0, 3, 1, 2)).reshape(B, 16 * Hp * Wp)

    # Classifier: single fused Pallas call.
    return mlp(flat, pp["fw1"], pp["fb1"], pp["fw2"], pp["fb2"], pp["fw3"], pp["fb3"])


# ---------------------------------------------------------------------------
# Parameters
# ---------------------------------------------------------------------------
def init_params(key):
    ks = jax.random.split(key, 10)
    s = 0.1
    w1 = jax.random.normal(ks[0], (6, 1, 5, 5), jnp.float32) * s
    b1 = jax.random.normal(ks[1], (6,), jnp.float32) * s
    w2 = jax.random.normal(ks[2], (16, 6, 5, 5), jnp.float32) * s
    b2 = jax.random.normal(ks[3], (16,), jnp.float32) * s
    fw1 = jax.random.normal(ks[4], (120, 256), jnp.float32) * s
    fb1 = jax.random.normal(ks[5], (120,), jnp.float32) * s
    fw2 = jax.random.normal(ks[6], (84, 120), jnp.float32) * s
    fb2 = jax.random.normal(ks[7], (84,), jnp.float32) * s
    fw3 = jax.random.normal(ks[8], (10, 84), jnp.float32) * s
    fb3 = jax.random.normal(ks[9], (10,), jnp.float32) * s
    return (w1, b1, w2, b2, fw1, fb1, fw2, fb2, fw3, fb3)


def prepare_params(params):
    """One-time preprocessing: matmul-ready layouts, contraction dims padded to 32-multiples."""
    (w1, b1, w2, b2, fw1, fb1, fw2, fb2, fw3, fb3) = params
    K1, K2 = 1 * 5 * 5, 6 * 5 * 5
    K1p, K2p = _round_up(K1, 32), _round_up(K2, 32)                # 32, 160
    w1m = jnp.zeros((K1p, 6), jnp.float32).at[:K1, :].set(w1.reshape(6, K1).T)
    w2m = jnp.zeros((K2p, 16), jnp.float32).at[:K2, :].set(w2.reshape(16, K2).T)
    return dict(
        w1m=w1m, b1=b1.reshape(1, -1),
        w2m=w2m, b2=b2.reshape(1, -1),
        fw1=fw1.T, fb1=fb1.reshape(1, -1),
        fw2=fw2.T, fb2=fb2.reshape(1, -1),
        fw3=fw3.T, fb3=fb3.reshape(1, -1),
    )


if __name__ == "__main__":
    root = jax.random.PRNGKey(0)
    pkey, xkey = jax.random.split(root)
    params = init_params(pkey)
    pp = prepare_params(params)

    # Input shape implied by the module: (B, 1, 28, 28) so that 16*4*4 = 256 holds.
    x = jax.random.normal(xkey, (2, 1, 28, 28), jnp.float32)

    fwd = jax.jit(lambda xx: lenet_forward(xx, pp))
    out = jax.block_until_ready(fwd(x))

    assert out.shape == (2, 10), out.shape
    assert out.dtype == jnp.float32
    assert bool(jnp.all(jnp.isfinite(out)))
    print("KERNEL_OK")
</pallas_src>

<mosaic_0001>
module attributes {stable_mosaic.version = 11 : i64} {
  func.func @_conv_pool_kernel(%arg0: i32, %arg1: memref<288x32xf32, #tpu.memory_space<vmem>>, %arg2: memref<288x32xf32, #tpu.memory_space<vmem>>, %arg3: memref<288x32xf32, #tpu.memory_space<vmem>>, %arg4: memref<288x32xf32, #tpu.memory_space<vmem>>, %arg5: memref<32x6xf32, #tpu.memory_space<vmem>>, %arg6: memref<1x6xf32, #tpu.memory_space<vmem>>, %arg7: memref<288x6xf32, #tpu.memory_space<vmem>>) attributes {dimension_semantics = [#tpu.dimension_semantics<parallel>], iteration_bounds = array<i64: 1>, scalar_prefetch = 0 : i64, scratch_operands = 0 : i64, tpu.core_type = #tpu.core_type<tc>, window_params = [{transform_indices = @transform_0, window_bounds = array<i64: 288, 32>}, {transform_indices = @transform_1, window_bounds = array<i64: 288, 32>}, {transform_indices = @transform_2, window_bounds = array<i64: 288, 32>}, {transform_indices = @transform_3, window_bounds = array<i64: 288, 32>}, {pipeline_mode = #tpu.pipeline_mode<synchronous>, transform_indices = @transform_4, window_bounds = array<i64: 32, 6>}, {pipeline_mode = #tpu.pipeline_mode<synchronous>, transform_indices = @transform_5, window_bounds = array<i64: 1, 6>}, {transform_indices = @transform_6, window_bounds = array<i64: 288, 6>}]} {
    %c0 = arith.constant 0 : index
    %c0_0 = arith.constant 0 : index
    %0 = vector.load %arg5[%c0, %c0_0] : memref<32x6xf32, #tpu.memory_space<vmem>>, vector<32x6xf32>
    %c0_1 = arith.constant 0 : index
    %c0_2 = arith.constant 0 : index
    %1 = vector.load %arg6[%c0_1, %c0_2] : memref<1x6xf32, #tpu.memory_space<vmem>>, vector<1x6xf32>
    %c0_3 = arith.constant 0 : index
    %c0_4 = arith.constant 0 : index
    %2 = vector.load %arg1[%c0_3, %c0_4] : memref<288x32xf32, #tpu.memory_space<vmem>>, vector<288x32xf32>
    %cst = arith.constant dense<0.000000e+00> : vector<288x6xf32>
    %3 = tpu.matmul %2, %0, %cst {dimension_numbers = #tpu.dot_dimension_numbers<[1], [0], [0], [1], [0, 0, 1, 1], [], []>} : vector<288x32xf32>, vector<32x6xf32>, vector<288x6xf32> -> vector<288x6xf32>
    %4 = vector.broadcast %1 : vector<1x6xf32> to vector<288x6xf32>
    %5 = arith.addf %3, %4 : vector<288x6xf32>
    %c0_5 = arith.constant 0 : index
    %c0_6 = arith.constant 0 : index
    %6 = vector.load %arg2[%c0_5, %c0_6] : memref<288x32xf32, #tpu.memory_space<vmem>>, vector<288x32xf32>
    %cst_7 = arith.constant dense<0.000000e+00> : vector<288x6xf32>
    %7 = tpu.matmul %6, %0, %cst_7 {dimension_numbers = #tpu.dot_dimension_numbers<[1], [0], [0], [1], [0, 0, 1, 1], [], []>} : vector<288x32xf32>, vector<32x6xf32>, vector<288x6xf32> -> vector<288x6xf32>
    %8 = vector.broadcast %1 : vector<1x6xf32> to vector<288x6xf32>
    %9 = arith.addf %7, %8 : vector<288x6xf32>
    %10 = arith.maximumf %5, %9 : vector<288x6xf32>
    %c0_8 = arith.constant 0 : index
    %c0_9 = arith.constant 0 : index
    %11 = vector.load %arg3[%c0_8, %c0_9] : memref<288x32xf32, #tpu.memory_space<vmem>>, vector<288x32xf32>
    %cst_10 = arith.constant dense<0.000000e+00> : vector<288x6xf32>
    %12 = tpu.matmul %11, %0, %cst_10 {dimension_numbers = #tpu.dot_dimension_numbers<[1], [0], [0], [1], [0, 0, 1, 1], [], []>} : vector<288x32xf32>, vector<32x6xf32>, vector<288x6xf32> -> vector<288x6xf32>
    %13 = vector.broadcast %1 : vector<1x6xf32> to vector<288x6xf32>
    %14 = arith.addf %12, %13 : vector<288x6xf32>
    %c0_11 = arith.constant 0 : index
    %c0_12 = arith.constant 0 : index
    %15 = vector.load %arg4[%c0_11, %c0_12] : memref<288x32xf32, #tpu.memory_space<vmem>>, vector<288x32xf32>
    %cst_13 = arith.constant dense<0.000000e+00> : vector<288x6xf32>
    %16 = tpu.matmul %15, %0, %cst_13 {dimension_numbers = #tpu.dot_dimension_numbers<[1], [0], [0], [1], [0, 0, 1, 1], [], []>} : vector<288x32xf32>, vector<32x6xf32>, vector<288x6xf32> -> vector<288x6xf32>
    %17 = vector.broadcast %1 : vector<1x6xf32> to vector<288x6xf32>
    %18 = arith.addf %16, %17 : vector<288x6xf32>
    %19 = arith.maximumf %14, %18 : vector<288x6xf32>
    %20 = arith.maximumf %10, %19 : vector<288x6xf32>
    %c0_14 = arith.constant 0 : index
    %c0_15 = arith.constant 0 : index
    %21 = vector.load %arg7[%c0_14, %c0_15] : memref<288x6xf32, #tpu.memory_space<vmem>>, vector<288x6xf32>
    tpu.vector_store %arg7[%c0_14, %c0_15], %20 {strides = array<i32>} : memref<288x6xf32, #tpu.memory_space<vmem>>, vector<288x6xf32>,
    return
  }
  func.func @transform_0(%arg0: i32) -> (i32, i32) {
    %c0_i32 = arith.constant 0 : i32
    %c0_i32_0 = arith.constant 0 : i32
    return %arg0, %c0_i32 : i32, i32
  }
  func.func @transform_1(%arg0: i32) -> (i32, i32) {
    %c0_i32 = arith.constant 0 : i32
    %c0_i32_0 = arith.constant 0 : i32
    return %arg0, %c0_i32 : i32, i32
  }
  func.func @transform_2(%arg0: i32) -> (i32, i32) {
    %c0_i32 = arith.constant 0 : i32
    %c0_i32_0 = arith.constant 0 : i32
    return %arg0, %c0_i32 : i32, i32
  }
  func.func @transform_3(%arg0: i32) -> (i32, i32) {
    %c0_i32 = arith.constant 0 : i32
    %c0_i32_0 = arith.constant 0 : i32
    return %arg0, %c0_i32 : i32, i32
  }
  func.func @transform_4(%arg0: i32) -> (i32, i32) {
    %c0_i32 = arith.constant 0 : i32
    %c0_i32_0 = arith.constant 0 : i32
    %c0_i32_1 = arith.constant 0 : i32
    return %c0_i32, %c0_i32_0 : i32, i32
  }
  func.func @transform_5(%arg0: i32) -> (i32, i32) {
    %c0_i32 = arith.constant 0 : i32
    %c0_i32_0 = arith.constant 0 : i32
    %c0_i32_1 = arith.constant 0 : i32
    return %c0_i32, %c0_i32_0 : i32, i32
  }
  func.func @transform_6(%arg0: i32) -> (i32, i32) {
    %c0_i32 = arith.constant 0 : i32
    %c0_i32_0 = arith.constant 0 : i32
    return %arg0, %c0_i32 : i32, i32
  }
}

module attributes {stable_mosaic.version = 11 : i64} {
  func.func @_conv_pool_kernel(%arg0: i32, %arg1: memref<32x160xf32, #tpu.memory_space<vmem>>, %arg2: memref<32x160xf32, #tpu.memory_space<vmem>>, %arg3: memref<32x160xf32, #tpu.memory_space<vmem>>, %arg4: memref<32x160xf32, #tpu.memory_space<vmem>>, %arg5: memref<160x16xf32, #tpu.memory_space<vmem>>, %arg6: memref<1x16xf32, #tpu.memory_space<vmem>>, %arg7: memref<32x16xf32, #tpu.memory_space<vmem>>) attributes {dimension_semantics = [#tpu.dimension_semantics<parallel>], iteration_bounds = array<i64: 1>, scalar_prefetch = 0 : i64, scratch_operands = 0 : i64, tpu.core_type = #tpu.core_type<tc>, window_params = [{transform_indices = @transform_0, window_bounds = array<i64: 32, 160>}, {transform_indices = @transform_1, window_bounds = array<i64: 32, 160>}, {transform_indices = @transform_2, window_bounds = array<i64: 32, 160>}, {transform_indices = @transform_3, window_bounds = array<i64: 32, 160>}, {pipeline_mode = #tpu.pipeline_mode<synchronous>, transform_indices = @transform_4, window_bounds = array<i64: 160, 16>}, {pipeline_mode = #tpu.pipeline_mode<synchronous>, transform_indices = @transform_5, window_bounds = array<i64: 1, 16>}, {transform_indices = @transform_6, window_bounds = array<i64: 32, 16>}]} {
    %c0 = arith.constant 0 : index
    %c0_0 = arith.constant 0 : index
    %0 = vector.load %arg5[%c0, %c0_0] : memref<160x16xf32, #tpu.memory_space<vmem>>, vector<160x16xf32>
    %c0_1 = arith.constant 0 : index
    %c0_2 = arith.constant 0 : index
    %1 = vector.load %arg6[%c0_1, %c0_2] : memref<1x16xf32, #tpu.memory_space<vmem>>, vector<1x16xf32>
    %c0_3 = arith.constant 0 : index
    %c0_4 = arith.constant 0 : index
    %2 = vector.load %arg1[%c0_3, %c0_4] : memref<32x160xf32, #tpu.memory_space<vmem>>, vector<32x160xf32>
    %cst = arith.constant dense<0.000000e+00> : vector<32x16xf32>
    %3 = tpu.matmul %2, %0, %cst {dimension_numbers = #tpu.dot_dimension_numbers<[1], [0], [0], [1], [0, 0, 1, 1], [], []>} : vector<32x160xf32>, vector<160x16xf32>, vector<32x16xf32> -> vector<32x16xf32>
    %4 = vector.broadcast %1 : vector<1x16xf32> to vector<32x16xf32>
    %5 = arith.addf %3, %4 : vector<32x16xf32>
    %c0_5 = arith.constant 0 : index
    %c0_6 = arith.constant 0 : index
    %6 = vector.load %arg2[%c0_5, %c0_6] : memref<32x160xf32, #tpu.memory_space<vmem>>, vector<32x160xf32>
    %cst_7 = arith.constant dense<0.000000e+00> : vector<32x16xf32>
    %7 = tpu.matmul %6, %0, %cst_7 {dimension_numbers = #tpu.dot_dimension_numbers<[1], [0], [0], [1], [0, 0, 1, 1], [], []>} : vector<32x160xf32>, vector<160x16xf32>, vector<32x16xf32> -> vector<32x16xf32>
    %8 = vector.broadcast %1 : vector<1x16xf32> to vector<32x16xf32>
    %9 = arith.addf %7, %8 : vector<32x16xf32>
    %10 = arith.maximumf %5, %9 : vector<32x16xf32>
    %c0_8 = arith.constant 0 : index
    %c0_9 = arith.constant 0 : index
    %11 = vector.load %arg3[%c0_8, %c0_9] : memref<32x160xf32, #tpu.memory_space<vmem>>, vector<32x160xf32>
    %cst_10 = arith.constant dense<0.000000e+00> : vector<32x16xf32>
    %12 = tpu.matmul %11, %0, %cst_10 {dimension_numbers = #tpu.dot_dimension_numbers<[1], [0], [0], [1], [0, 0, 1, 1], [], []>} : vector<32x160xf32>, vector<160x16xf32>, vector<32x16xf32> -> vector<32x16xf32>
    %13 = vector.broadcast %1 : vector<1x16xf32> to vector<32x16xf32>
    %14 = arith.addf %12, %13 : vector<32x16xf32>
    %c0_11 = arith.constant 0 : index
    %c0_12 = arith.constant 0 : index
    %15 = vector.load %arg4[%c0_11, %c0_12] : memref<32x160xf32, #tpu.memory_space<vmem>>, vector<32x160xf32>
    %cst_13 = arith.constant dense<0.000000e+00> : vector<32x16xf32>
    %16 = tpu.matmul %15, %0, %cst_13 {dimension_numbers = #tpu.dot_dimension_numbers<[1], [0], [0], [1], [0, 0, 1, 1], [], []>} : vector<32x160xf32>, vector<160x16xf32>, vector<32x16xf32> -> vector<32x16xf32>
    %17 = vector.broadcast %1 : vector<1x16xf32> to vector<32x16xf32>
    %18 = arith.addf %16, %17 : vector<32x16xf32>
    %19 = arith.maximumf %14, %18 : vector<32x16xf32>
    %20 = arith.maximumf %10, %19 : vector<32x16xf32>
    %c0_14 = arith.constant 0 : index
    %c0_15 = arith.constant 0 : index
    %21 = vector.load %arg7[%c0_14, %c0_15] : memref<32x16xf32, #tpu.memory_space<vmem>>, vector<32x16xf32>
    tpu.vector_store %arg7[%c0_14, %c0_15], %20 {strides = array<i32>} : memref<32x16xf32, #tpu.memory_space<vmem>>, vector<32x16xf32>,
    return
  }
  func.func @transform_0(%arg0: i32) -> (i32, i32) {
    %c0_i32 = arith.constant 0 : i32
    %c0_i32_0 = arith.constant 0 : i32
    return %arg0, %c0_i32 : i32, i32
  }
  func.func @transform_1(%arg0: i32) -> (i32, i32) {
    %c0_i32 = arith.constant 0 : i32
    %c0_i32_0 = arith.constant 0 : i32
    return %arg0, %c0_i32 : i32, i32
  }
  func.func @transform_2(%arg0: i32) -> (i32, i32) {
    %c0_i32 = arith.constant 0 : i32
    %c0_i32_0 = arith.constant 0 : i32
    return %arg0, %c0_i32 : i32, i32
  }
  func.func @transform_3(%arg0: i32) -> (i32, i32) {
    %c0_i32 = arith.constant 0 : i32
    %c0_i32_0 = arith.constant 0 : i32
    return %arg0, %c0_i32 : i32, i32
  }
  func.func @transform_4(%arg0: i32) -> (i32, i32) {
    %c0_i32 = arith.constant 0 : i32
    %c0_i32_0 = arith.constant 0 : i32
    %c0_i32_1 = arith.constant 0 : i32
    return %c0_i32, %c0_i32_0 : i32, i32
  }
  func.func @transform_5(%arg0: i32) -> (i32, i32) {
    %c0_i32 = arith.constant 0 : i32
    %c0_i32_0 = arith.constant 0 : i32
    %c0_i32_1 = arith.constant 0 : i32
    return %c0_i32, %c0_i32_0 : i32, i32
  }
  func.func @transform_6(%arg0: i32) -> (i32, i32) {
    %c0_i32 = arith.constant 0 : i32
    %c0_i32_0 = arith.constant 0 : i32
    return %arg0, %c0_i32 : i32, i32
  }
}

module attributes {stable_mosaic.version = 11 : i64} {
  func.func @_mlp_kernel(%arg0: i32, %arg1: memref<8x256xf32, #tpu.memory_space<vmem>>, %arg2: memref<256x120xf32, #tpu.memory_space<vmem>>, %arg3: memref<1x120xf32, #tpu.memory_space<vmem>>, %arg4: memref<120x84xf32, #tpu.memory_space<vmem>>, %arg5: memref<1x84xf32, #tpu.memory_space<vmem>>, %arg6: memref<84x10xf32, #tpu.memory_space<vmem>>, %arg7: memref<1x10xf32, #tpu.memory_space<vmem>>, %arg8: memref<8x10xf32, #tpu.memory_space<vmem>>) attributes {dimension_semantics = [#tpu.dimension_semantics<parallel>], iteration_bounds = array<i64: 1>, scalar_prefetch = 0 : i64, scratch_operands = 0 : i64, tpu.core_type = #tpu.core_type<tc>, window_params = [{transform_indices = @transform_0, window_bounds = array<i64: 8, 256>}, {pipeline_mode = #tpu.pipeline_mode<synchronous>, transform_indices = @transform_1, window_bounds = array<i64: 256, 120>}, {pipeline_mode = #tpu.pipeline_mode<synchronous>, transform_indices = @transform_2, window_bounds = array<i64: 1, 120>}, {pipeline_mode = #tpu.pipeline_mode<synchronous>, transform_indices = @transform_3, window_bounds = array<i64: 120, 84>}, {pipeline_mode = #tpu.pipeline_mode<synchronous>, transform_indices = @transform_4, window_bounds = array<i64: 1, 84>}, {pipeline_mode = #tpu.pipeline_mode<synchronous>, transform_indices = @transform_5, window_bounds = array<i64: 84, 10>}, {pipeline_mode = #tpu.pipeline_mode<synchronous>, transform_indices = @transform_6, window_bounds = array<i64: 1, 10>}, {transform_indices = @transform_7, window_bounds = array<i64: 8, 10>}]} {
    %c0 = arith.constant 0 : index
    %c0_0 = arith.constant 0 : index
    %0 = vector.load %arg1[%c0, %c0_0] : memref<8x256xf32, #tpu.memory_space<vmem>>, vector<8x256xf32>
    %c0_1 = arith.constant 0 : index
    %c0_2 = arith.constant 0 : index
    %1 = vector.load %arg2[%c0_1, %c0_2] : memref<256x120xf32, #tpu.memory_space<vmem>>, vector<256x120xf32>
    %cst = arith.constant dense<0.000000e+00> : vector<8x120xf32>
    %2 = tpu.matmul %0, %1, %cst {dimension_numbers = #tpu.dot_dimension_numbers<[1], [0], [0], [1], [0, 0, 1, 1], [], []>} : vector<8x256xf32>, vector<256x120xf32>, vector<8x120xf32> -> vector<8x120xf32>
    %c0_3 = arith.constant 0 : index
    %c0_4 = arith.constant 0 : index
    %3 = vector.load %arg3[%c0_3, %c0_4] : memref<1x120xf32, #tpu.memory_space<vmem>>, vector<1x120xf32>
    %4 = vector.broadcast %3 : vector<1x120xf32> to vector<8x120xf32>
    %5 = arith.addf %2, %4 : vector<8x120xf32>
    %cst_5 = arith.constant 0.000000e+00 : f32
    %6 = vector.broadcast %cst_5 : f32 to vector<8x120xf32>
    %7 = arith.maximumf %5, %6 : vector<8x120xf32>
    %c0_6 = arith.constant 0 : index
    %c0_7 = arith.constant 0 : index
    %8 = vector.load %arg4[%c0_6, %c0_7] : memref<120x84xf32, #tpu.memory_space<vmem>>, vector<120x84xf32>
    %cst_8 = arith.constant dense<0.000000e+00> : vector<8x84xf32>
    %9 = tpu.matmul %7, %8, %cst_8 {dimension_numbers = #tpu.dot_dimension_numbers<[1], [0], [0], [1], [0, 0, 1, 1], [], []>} : vector<8x120xf32>, vector<120x84xf32>, vector<8x84xf32> -> vector<8x84xf32>
    %c0_9 = arith.constant 0 : index
    %c0_10 = arith.constant 0 : index
    %10 = vector.load %arg5[%c0_9, %c0_10] : memref<1x84xf32, #tpu.memory_space<vmem>>, vector<1x84xf32>
    %11 = vector.broadcast %10 : vector<1x84xf32> to vector<8x84xf32>
    %12 = arith.addf %9, %11 : vector<8x84xf32>
    %cst_11 = arith.constant 0.000000e+00 : f32
    %13 = vector.broadcast %cst_11 : f32 to vector<8x84xf32>
    %14 = arith.maximumf %12, %13 : vector<8x84xf32>
    %c0_12 = arith.constant 0 : index
    %c0_13 = arith.constant 0 : index
    %15 = vector.load %arg6[%c0_12, %c0_13] : memref<84x10xf32, #tpu.memory_space<vmem>>, vector<84x10xf32>
    %cst_14 = arith.constant dense<0.000000e+00> : vector<8x10xf32>
    %16 = tpu.matmul %14, %15, %cst_14 {dimension_numbers = #tpu.dot_dimension_numbers<[1], [0], [0], [1], [0, 0, 1, 1], [], []>} : vector<8x84xf32>, vector<84x10xf32>, vector<8x10xf32> -> vector<8x10xf32>
    %c0_15 = arith.constant 0 : index
    %c0_16 = arith.constant 0 : index
    %17 = vector.load %arg7[%c0_15, %c0_16] : memref<1x10xf32, #tpu.memory_space<vmem>>, vector<1x10xf32>
    %18 = vector.broadcast %17 : vector<1x10xf32> to vector<8x10xf32>
    %19 = arith.addf %16, %18 : vector<8x10xf32>
    %c0_17 = arith.constant 0 : index
    %c0_18 = arith.constant 0 : index
    %20 = vector.load %arg8[%c0_17, %c0_18] : memref<8x10xf32, #tpu.memory_space<vmem>>, vector<8x10xf32>
    tpu.vector_store %arg8[%c0_17, %c0_18], %19 {strides = array<i32>} : memref<8x10xf32, #tpu.memory_space<vmem>>, vector<8x10xf32>,
    return
  }
  func.func @transform_0(%arg0: i32) -> (i32, i32) {
    %c0_i32 = arith.constant 0 : i32
    %c0_i32_0 = arith.constant 0 : i32
    return %arg0, %c0_i32 : i32, i32
  }
  func.func @transform_1(%arg0: i32) -> (i32, i32) {
    %c0_i32 = arith.constant 0 : i32
    %c0_i32_0 = arith.constant 0 : i32
    %c0_i32_1 = arith.constant 0 : i32
    return %c0_i32, %c0_i32_0 : i32, i32
  }
  func.func @transform_2(%arg0: i32) -> (i32, i32) {
    %c0_i32 = arith.constant 0 : i32
    %c0_i32_0 = arith.constant 0 : i32
    %c0_i32_1 = arith.constant 0 : i32
    return %c0_i32, %c0_i32_0 : i32, i32
  }
  func.func @transform_3(%arg0: i32) -> (i32, i32) {
    %c0_i32 = arith.constant 0 : i32
    %c0_i32_0 = arith.constant 0 : i32
    %c0_i32_1 = arith.constant 0 : i32
    return %c0_i32, %c0_i32_0 : i32, i32
  }
  func.func @transform_4(%arg0: i32) -> (i32, i32) {
    %c0_i32 = arith.constant 0 : i32
    %c0_i32_0 = arith.constant 0 : i32
    %c0_i32_1 = arith.constant 0 : i32
    return %c0_i32, %c0_i32_0 : i32, i32
  }
  func.func @transform_5(%arg0: i32) -> (i32, i32) {
    %c0_i32 = arith.constant 0 : i32
    %c0_i32_0 = arith.constant 0 : i32
    %c0_i32_1 = arith.constant 0 : i32
    return %c0_i32, %c0_i32_0 : i32, i32
  }
  func.func @transform_6(%arg0: i32) -> (i32, i32) {
    %c0_i32 = arith.constant 0 : i32
    %c0_i32_0 = arith.constant 0 : i32
    %c0_i32_1 = arith.constant 0 : i32
    return %c0_i32, %c0_i32_0 : i32, i32
  }
  func.func @transform_7(%arg0: i32) -> (i32, i32) {
    %c0_i32 = arith.constant 0 : i32
    %c0_i32_0 = arith.constant 0 : i32
    return %arg0, %c0_i32 : i32, i32
  }
}

</mosaic_0001>

<llo_original>
// kernel: _lambda_.3
$region0: #{_lambda_.3}
  #allocation0 [shape = 'u32[]', space=smem, size = 0x4, offset = 0x4, fixed_abs, tag = 'smem constant byte address 0x4 - core index']
  #allocation1 [shape = 'u32[144,128]{1,0:T(1,128)}', space=vmem, size = 0x12000, scoped, tag = 'internal scratch']
  %s0 = inlined_call_operand.vmem [shape: f32[288,32], index: 0, kind: input, shape index: {}]
  %s1 = inlined_call_operand.vmem [shape: f32[288,32], index: 1, kind: input, shape index: {}]
  %s2 = inlined_call_operand.vmem [shape: f32[288,32], index: 2, kind: input, shape index: {}]
  %s3 = inlined_call_operand.vmem [shape: f32[288,32], index: 3, kind: input, shape index: {}]
  %s4 = inlined_call_operand.vmem [shape: f32[32,6], index: 4, kind: input, shape index: {}]
  %s5 = inlined_call_operand.vmem [shape: f32[1,6], index: 5, kind: input, shape index: {}]
  %s6 = inlined_call_operand.vmem [shape: f32[288,6], index: 6, kind: output, shape index: {}]
  %s7 = sld [smem:[#allocation0]]
  $region34: #{_lambda_.3} parent=0
    _
  %s9 = ssub.s32 1, %s7
  %s10 = scalar_select 0, %s9, %s7
  // Predicated region
  $region2: #{_lambda_.3} parent=0 // pred_check
    _
  $region3: #{_lambda_.3} parent=0 // pred_check_branch
    %12 = sbr.rel (0) target = $region5
  $region4: #{_lambda_.3} parent=0 // pred_region
    _
  $region5: #{_lambda_.3} parent=0 // pred_fallthru
    _
  // Predicated region
  $region6: #{_lambda_.3} parent=0 // pred_check
    _
  $region7: #{_lambda_.3} parent=0 // pred_check_branch
    %14 = sbr.rel (0) target = $region9
  $region8: #{_lambda_.3} parent=0 // pred_region
    _
  $region9: #{_lambda_.3} parent=0 // pred_fallthru
    _
  // Predicated region
  $region10: #{_lambda_.3} parent=0 // pred_check
    _
  $region11: #{_lambda_.3} parent=0 // pred_check_branch
    %16 = sbr.rel (0) target = $region13
  $region12: #{_lambda_.3} parent=0 // pred_region
    _
  $region13: #{_lambda_.3} parent=0 // pred_fallthru
    _
  // Predicated region
  $region14: #{_lambda_.3} parent=0 // pred_check
    _
  $region15: #{_lambda_.3} parent=0 // pred_check_branch
    %18 = sbr.rel (0) target = $region17
  $region16: #{_lambda_.3} parent=0 // pred_region
    _
  $region17: #{_lambda_.3} parent=0 // pred_fallthru
    _
  // Predicated region
  $region18: #{_lambda_.3} parent=0 // pred_check
    _
  $region19: #{_lambda_.3} parent=0 // pred_check_branch
    %20 = sbr.rel (0) target = $region21
  $region20: #{_lambda_.3} parent=0 // pred_region
    _
  $region21: #{_lambda_.3} parent=0 // pred_fallthru
    _
  // Predicated region
  $region22: #{_lambda_.3} parent=0 // pred_check
    _
  $region23: #{_lambda_.3} parent=0 // pred_check_branch
    %22 = sbr.rel (0) target = $region25
  $region24: #{_lambda_.3} parent=0 // pred_region
    _
  $region25: #{_lambda_.3} parent=0 // pred_fallthru
    _
  %v23 = vld [vmem:[%s4] sm:$0xff]
  %v24 = vld [vmem:[%s4 + $0x8] sm:$0xff]
  %v25 = vld [vmem:[%s4 + $0x10] sm:$0xff]
  %v26 = vld [vmem:[%s4 + $0x18] sm:$0xff]
  %v27 = vld [vmem:[%s5] sm:$0x1]
  %v28 = vld [vmem:[%s0] sm:$0xff]
  %v29 = vld [vmem:[%s0 + $0x8] sm:$0xff]
  %v30 = vld [vmem:[%s0 + $0x10] sm:$0xff]
  %v31 = vld [vmem:[%s0 + $0x18] sm:$0xff]
  %v32 = vld [vmem:[%s0 + $0x20] sm:$0xff]
  %v33 = vld [vmem:[%s0 + $0x28] sm:$0xff]
  %v34 = vld [vmem:[%s0 + $0x30] sm:$0xff]
  %v35 = vld [vmem:[%s0 + $0x38] sm:$0xff]
  %v36 = vld [vmem:[%s0 + $0x40] sm:$0xff]
  %v37 = vld [vmem:[%s0 + $0x48] sm:$0xff]
  %v38 = vld [vmem:[%s0 + $0x50] sm:$0xff]
  %v39 = vld [vmem:[%s0 + $0x58] sm:$0xff]
  %v40 = vld [vmem:[%s0 + $0x60] sm:$0xff]
  %v41 = vld [vmem:[%s0 + $0x68] sm:$0xff]
  %v42 = vld [vmem:[%s0 + $0x70] sm:$0xff]
  %v43 = vld [vmem:[%s0 + $0x78] sm:$0xff]
  %v44 = vld [vmem:[%s0 + $0x80] sm:$0xff]
  %v45 = vld [vmem:[%s0 + $0x88] sm:$0xff]
  %v46 = vld [vmem:[%s0 + $0x90] sm:$0xff]
  %v47 = vld [vmem:[%s0 + $0x98] sm:$0xff]
  %v48 = vld [vmem:[%s0 + $0xa0] sm:$0xff]
  %v49 = vld [vmem:[%s0 + $0xa8] sm:$0xff]
  %v50 = vld [vmem:[%s0 + $0xb0] sm:$0xff]
  %v51 = vld [vmem:[%s0 + $0xb8] sm:$0xff]
  %v52 = vld [vmem:[%s0 + $0xc0] sm:$0xff]
  %v53 = vld [vmem:[%s0 + $0xc8] sm:$0xff]
  %v54 = vld [vmem:[%s0 + $0xd0] sm:$0xff]
  %v55 = vld [vmem:[%s0 + $0xd8] sm:$0xff]
  %v56 = vld [vmem:[%s0 + $0xe0] sm:$0xff]
  %v57 = vld [vmem:[%s0 + $0xe8] sm:$0xff]
  %v58 = vld [vmem:[%s0 + $0xf0] sm:$0xff]
  %v59 = vld [vmem:[%s0 + $0xf8] sm:$0xff]
  %v60 = vld [vmem:[%s0 + $0x100] sm:$0xff]
  %v61 = vld [vmem:[%s0 + $0x108] sm:$0xff]
  %v62 = vld [vmem:[%s0 + $0x110] sm:$0xff]
  %v63 = vld [vmem:[%s0 + $0x118] sm:$0xff]
  %v65 = vlaneseq
  %v66 = vshrl.u32 %v65, 7
  %v67 = vsub.s32 0, %v66
  %v68 = vrot.slane %v27, %v67
  %vm70 = vcmask 261120
  %v72 = vsel %vm70, %v28, 0
  %v75 = vsel %vm70, %v29, 0
  %v78 = vsel %vm70, %v30, 0
  %v81 = vsel %vm70, %v31, 0
  %v84 = vsel %vm70, %v32, 0
  %v87 = vsel %vm70, %v33, 0
  %v90 = vsel %vm70, %v34, 0
  %v93 = vsel %vm70, %v35, 0
  %v96 = vsel %vm70, %v36, 0
  %v99 = vsel %vm70, %v37, 0
  %v102 = vsel %vm70, %v38, 0
  %v105 = vsel %vm70, %v39, 0
  %v108 = vsel %vm70, %v40, 0
  %v111 = vsel %vm70, %v41, 0
  %v114 = vsel %vm70, %v42, 0
  %v117 = vsel %vm70, %v43, 0
  %v120 = vsel %vm70, %v44, 0
  %v123 = vsel %vm70, %v45, 0
  %v126 = vsel %vm70, %v46, 0
  %v129 = vsel %vm70, %v47, 0
  %v132 = vsel %vm70, %v48, 0
  %v135 = vsel %vm70, %v49, 0
  %v138 = vsel %vm70, %v50, 0
  %v141 = vsel %vm70, %v51, 0
  %v144 = vsel %vm70, %v52, 0
  %v147 = vsel %vm70, %v53, 0
  %v150 = vsel %vm70, %v54, 0
  %v153 = vsel %vm70, %v55, 0
  %v156 = vsel %vm70, %v56, 0
  %v159 = vsel %vm70, %v57, 0
  %v162 = vsel %vm70, %v58, 0
  %v165 = vsel %vm70, %v59, 0
  %v168 = vsel %vm70, %v60, 0
  %v171 = vsel %vm70, %v61, 0
  %v174 = vsel %vm70, %v62, 0
  %v177 = vsel %vm70, %v63, 0
  %179 = vmatprep.subr.mxu0 0.0
  %180 = vmatpush1.msra.mxu0 0.0
  %181 = vmatprep.subr.mxu0 0.0
  %182 = vmatpush1.msra.mxu0 0.0
  %183 = vmatprep.subr.mxu0 0.0
  %184 = vmatpush1.msra.mxu0 0.0
  %185 = vmatprep.subr.mxu0 0.0
  %186 = vmatpush1.msra.mxu0 0.0
  %187 = vmatprep.subr.mxu0 0.0
  %188 = vmatpush1.msra.mxu0 0.0
  %189 = vmatprep.subr.mxu0 0.0
  %190 = vmatpush1.msra.mxu0 0.0
  %191 = vmatprep.subr.mxu0 0.0
  %192 = vmatpush1.msra.mxu0 0.0
  %193 = vmatprep.subr.mxu0 0.0
  %194 = vmatpush1.msra.mxu0 0.0
  %195 = vmatprep.subr.mxu0 0.0
  %196 = vmatpush1.msra.mxu0 0.0
  %197 = vmatprep.subr.mxu0 0.0
  %198 = vmatpush1.msra.mxu0 0.0
  %199 = vmatprep.subr.mxu0 0.0
  %200 = vmatpush1.msra.mxu0 0.0
  %201 = vmatprep.subr.mxu0 0.0
  %202 = vmatpush1.msra.mxu0 0.0
  %203 = vmatprep.subr.mxu0 0.0
  %204 = vmatpush1.msra.mxu0 %v26
  %205 = vmatprep.subr.mxu0 0.0
  %206 = vmatpush1.msra.mxu0 %v25
  %207 = vmatprep.subr.mxu0 0.0
  %208 = vmatpush1.msra.mxu0 %v24
  %209 = vmatprep.subr.mxu0 0.0
  %210 = vmatpush1.msra.mxu0 %v23
  %211 = vmatprep.subr.mxu0 0.0
  %212 = vmatpush2.msra.mxu0 0.0
  %213 = vmatprep.subr.mxu0 0.0
  %214 = vmatpush2.msra.mxu0 0.0
  %215 = vmatprep.subr.mxu0 0.0
  %216 = vmatpush2.msra.mxu0 0.0
  %217 = vmatprep.subr.mxu0 0.0
  %218 = vmatpush2.msra.mxu0 0.0
  %219 = vmatprep.subr.mxu0 0.0
  %220 = vmatpush2.msra.mxu0 0.0
  %221 = vmatprep.subr.mxu0 0.0
  %222 = vmatpush2.msra.mxu0 0.0
  %223 = vmatprep.subr.mxu0 0.0
  %224 = vmatpush2.msra.mxu0 0.0
  %225 = vmatprep.subr.mxu0 0.0
  %226 = vmatpush2.msra.mxu0 0.0
  %227 = vmatprep.subr.mxu0 0.0
  %228 = vmatpush2.msra.mxu0 0.0
  %229 = vmatprep.subr.mxu0 0.0
  %230 = vmatpush2.msra.mxu0 0.0
  %231 = vmatprep.subr.mxu0 0.0
  %232 = vmatpush2.msra.mxu0 0.0
  %233 = vmatprep.subr.mxu0 0.0
  %234 = vmatpush2.msra.mxu0 0.0
  %235 = vmatprep.subr.mxu0 0.0
  %236 = vmatpush2.msra.mxu0 0.0
  %237 = vmatprep.subr.mxu0 0.0
  %238 = vmatpush2.msra.mxu0 0.0
  %239 = vmatprep.subr.mxu0 0.0
  %240 = vmatpush2.msra.mxu0 0.0
  %241 = vmatprep.subr.mxu0 0.0
  %242 = vmatpush2.msra.mxu0 0.0
  %243 = vmatprep.mubr.f32.mxu0 0.0
  %244 = vmatmul.mubr.f32.gmra.mxu0 %v72
  %v245 = vpop.f32.mrf.mxu0
  %v246 = vadd.f32 %v68, %v245
  %v247 = vpop.f32.mrf.mxu0
  %248 = vmatprep.mubr.f32.mxu0 0.0
  %249 = vmatmul.mubr.f32.gmra.mxu0 %v75
  %v250 = vpop.f32.mrf.mxu0
  %v251 = vadd.f32 %v68, %v250
  %v252 = vpop.f32.mrf.mxu0
  %253 = vmatprep.mubr.f32.mxu0 0.0
  %254 = vmatmul.mubr.f32.gmra.mxu0 %v78
  %v255 = vpop.f32.mrf.mxu0
  %v256 = vadd.f32 %v68, %v255
  %v257 = vpop.f32.mrf.mxu0
  %258 = vmatprep.mubr.f32.mxu0 0.0
  %259 = vmatmul.mubr.f32.gmra.mxu0 %v81
  %v260 = vpop.f32.mrf.mxu0
  %v261 = vadd.f32 %v68, %v260
  %v262 = vpop.f32.mrf.mxu0
  %263 = vmatprep.mubr.f32.mxu0 0.0
  %264 = vmatmul.mubr.f32.gmra.mxu0 %v84
  %v265 = vpop.f32.mrf.mxu0
  %v266 = vadd.f32 %v68, %v265
  %v267 = vpop.f32.mrf.mxu0
  %268 = vmatprep.mubr.f32.mxu0 0.0
  %269 = vmatmul.mubr.f32.gmra.mxu0 %v87
  %v270 = vpop.f32.mrf.mxu0
  %v271 = vadd.f32 %v68, %v270
  %v272 = vpop.f32.mrf.mxu0
  %273 = vmatprep.mubr.f32.mxu0 0.0
  %274 = vmatmul.mubr.f32.gmra.mxu0 %v90
  %v275 = vpop.f32.mrf.mxu0
  %v276 = vadd.f32 %v68, %v275
  %v277 = vpop.f32.mrf.mxu0
  %278 = vmatprep.mubr.f32.mxu0 0.0
  %279 = vmatmul.mubr.f32.gmra.mxu0 %v93
  %v280 = vpop.f32.mrf.mxu0
  %v281 = vadd.f32 %v68, %v280
  %v282 = vpop.f32.mrf.mxu0
  %283 = vmatprep.mubr.f32.mxu0 0.0
  %284 = vmatmul.mubr.f32.gmra.mxu0 %v96
  %v285 = vpop.f32.mrf.mxu0
  %v286 = vadd.f32 %v68, %v285
  %v287 = vpop.f32.mrf.mxu0
  %288 = vmatprep.mubr.f32.mxu0 0.0
  %289 = vmatmul.mubr.f32.gmra.mxu0 %v99
  %v290 = vpop.f32.mrf.mxu0
  %v291 = vadd.f32 %v68, %v290
  %v292 = vpop.f32.mrf.mxu0
  %293 = vmatprep.mubr.f32.mxu0 0.0
  %294 = vmatmul.mubr.f32.gmra.mxu0 %v102
  %v295 = vpop.f32.mrf.mxu0
  %v296 = vadd.f32 %v68, %v295
  %v297 = vpop.f32.mrf.mxu0
  %298 = vmatprep.mubr.f32.mxu0 0.0
  %299 = vmatmul.mubr.f32.gmra.mxu0 %v105
  %v300 = vpop.f32.mrf.mxu0
  %v301 = vadd.f32 %v68, %v300
  %v302 = vpop.f32.mrf.mxu0
  %303 = vmatprep.mubr.f32.mxu0 0.0
  %304 = vmatmul.mubr.f32.gmra.mxu0 %v108
  %v305 = vpop.f32.mrf.mxu0
  %v306 = vadd.f32 %v68, %v305
  %v307 = vpop.f32.mrf.mxu0
  %308 = vmatprep.mubr.f32.mxu0 0.0
  %309 = vmatmul.mubr.f32.gmra.mxu0 %v111
  %v310 = vpop.f32.mrf.mxu0
  %v311 = vadd.f32 %v68, %v310
  %v312 = vpop.f32.mrf.mxu0
  %313 = vmatprep.mubr.f32.mxu0 0.0
  %314 = vmatmul.mubr.f32.gmra.mxu0 %v114
  %v315 = vpop.f32.mrf.mxu0
  %v316 = vadd.f32 %v68, %v315
  %v317 = vpop.f32.mrf.mxu0
  %318 = vmatprep.mubr.f32.mxu0 0.0
  %319 = vmatmul.mubr.f32.gmra.mxu0 %v117
  %v320 = vpop.f32.mrf.mxu0
  %v321 = vadd.f32 %v68, %v320
  %v322 = vpop.f32.mrf.mxu0
  %323 = vmatprep.mubr.f32.mxu0 0.0
  %324 = vmatmul.mubr.f32.gmra.mxu0 %v120
  %v325 = vpop.f32.mrf.mxu0
  %v326 = vadd.f32 %v68, %v325
  %v327 = vpop.f32.mrf.mxu0
  %328 = vmatprep.mubr.f32.mxu0 0.0
  %329 = vmatmul.mubr.f32.gmra.mxu0 %v123
  %v330 = vpop.f32.mrf.mxu0
  %v331 = vadd.f32 %v68, %v330
  %v332 = vpop.f32.mrf.mxu0
  %333 = vmatprep.mubr.f32.mxu0 0.0
  %334 = vmatmul.mubr.f32.gmra.mxu0 %v126
  %v335 = vpop.f32.mrf.mxu0
  %v336 = vadd.f32 %v68, %v335
  %v337 = vpop.f32.mrf.mxu0
  %338 = vmatprep.mubr.f32.mxu0 0.0
  %339 = vmatmul.mubr.f32.gmra.mxu0 %v129
  %v340 = vpop.f32.mrf.mxu0
  %v341 = vadd.f32 %v68, %v340
  %v342 = vpop.f32.mrf.mxu0
  %343 = vmatprep.mubr.f32.mxu0 0.0
  %344 = vmatmul.mubr.f32.gmra.mxu0 %v132
  %v345 = vpop.f32.mrf.mxu0
  %v346 = vadd.f32 %v68, %v345
  %v347 = vpop.f32.mrf.mxu0
  %348 = vmatprep.mubr.f32.mxu0 0.0
  %349 = vmatmul.mubr.f32.gmra.mxu0 %v135
  %v350 = vpop.f32.mrf.mxu0
  %v351 = vadd.f32 %v68, %v350
  %v352 = vpop.f32.mrf.mxu0
  %353 = vmatprep.mubr.f32.mxu0 0.0
  %354 = vmatmul.mubr.f32.gmra.mxu0 %v138
  %v355 = vpop.f32.mrf.mxu0
  %v356 = vadd.f32 %v68, %v355
  %v357 = vpop.f32.mrf.mxu0
  %358 = vmatprep.mubr.f32.mxu0 0.0
  %359 = vmatmul.mubr.f32.gmra.mxu0 %v141
  %v360 = vpop.f32.mrf.mxu0
  %v361 = vadd.f32 %v68, %v360
  %v362 = vpop.f32.mrf.mxu0
  %363 = vmatprep.mubr.f32.mxu0 0.0
  %364 = vmatmul.mubr.f32.gmra.mxu0 %v144
  %v365 = vpop.f32.mrf.mxu0
  %v366 = vadd.f32 %v68, %v365
  %v367 = vpop.f32.mrf.mxu0
  %368 = vmatprep.mubr.f32.mxu0 0.0
  %369 = vmatmul.mubr.f32.gmra.mxu0 %v147
  %v370 = vpop.f32.mrf.mxu0
  %v371 = vadd.f32 %v68, %v370
  %v372 = vpop.f32.mrf.mxu0
  %373 = vmatprep.mubr.f32.mxu0 0.0
  %374 = vmatmul.mubr.f32.gmra.mxu0 %v150
  %v375 = vpop.f32.mrf.mxu0
  %v376 = vadd.f32 %v68, %v375
  %v377 = vpop.f32.mrf.mxu0
  %378 = vmatprep.mubr.f32.mxu0 0.0
  %379 = vmatmul.mubr.f32.gmra.mxu0 %v153
  %v380 = vpop.f32.mrf.mxu0
  %v381 = vadd.f32 %v68, %v380
  %v382 = vpop.f32.mrf.mxu0
  %383 = vmatprep.mubr.f32.mxu0 0.0
  %384 = vmatmul.mubr.f32.gmra.mxu0 %v156
  %v385 = vpop.f32.mrf.mxu0
  %v386 = vadd.f32 %v68, %v385
  %v387 = vpop.f32.mrf.mxu0
  %388 = vmatprep.mubr.f32.mxu0 0.0
  %389 = vmatmul.mubr.f32.gmra.mxu0 %v159
  %v390 = vpop.f32.mrf.mxu0
  %v391 = vadd.f32 %v68, %v390
  %v392 = vpop.f32.mrf.mxu0
  %393 = vmatprep.mubr.f32.mxu0 0.0
  %394 = vmatmul.mubr.f32.gmra.mxu0 %v162
  %v395 = vpop.f32.mrf.mxu0
  %v396 = vadd.f32 %v68, %v395
  %v397 = vpop.f32.mrf.mxu0
  %398 = vmatprep.mubr.f32.mxu0 0.0
  %399 = vmatmul.mubr.f32.gmra.mxu0 %v165
  %v400 = vpop.f32.mrf.mxu0
  %v401 = vadd.f32 %v68, %v400
  %v402 = vpop.f32.mrf.mxu0
  %403 = vmatprep.mubr.f32.mxu0 0.0
  %404 = vmatmul.mubr.f32.gmra.mxu0 %v168
  %v405 = vpop.f32.mrf.mxu0
  %v406 = vadd.f32 %v68, %v405
  %v407 = vpop.f32.mrf.mxu0
  %408 = vmatprep.mubr.f32.mxu0 0.0
  %409 = vmatmul.mubr.f32.gmra.mxu0 %v171
  %v410 = vpop.f32.mrf.mxu0
  %v411 = vadd.f32 %v68, %v410
  %v412 = vpop.f32.mrf.mxu0
  %413 = vmatprep.mubr.f32.mxu0 0.0
  %414 = vmatmul.mubr.f32.gmra.mxu0 %v174
  %v415 = vpop.f32.mrf.mxu0
  %v416 = vadd.f32 %v68, %v415
  %v417 = vpop.f32.mrf.mxu0
  %418 = vmatprep.mubr.f32.mxu0 0.0
  %419 = vmatmul.mubr.f32.gmra.mxu0 %v177
  %v420 = vpop.f32.mrf.mxu0
  %v421 = vadd.f32 %v68, %v420
  %v422 = vpop.f32.mrf.mxu0
  %423 = vdwg.mxu0
  %v424 = vld [vmem:[%s1] sm:$0xff]
  %v425 = vld [vmem:[%s1 + $0x8] sm:$0xff]
  %v426 = vld [vmem:[%s1 + $0x10] sm:$0xff]
  %v427 = vld [vmem:[%s1 + $0x18] sm:$0xff]
  %v428 = vld [vmem:[%s1 + $0x20] sm:$0xff]
  %v429 = vld [vmem:[%s1 + $0x28] sm:$0xff]
  %v430 = vld [vmem:[%s1 + $0x30] sm:$0xff]
  %v431 = vld [vmem:[%s1 + $0x38] sm:$0xff]
  %v432 = vld [vmem:[%s1 + $0x40] sm:$0xff]
  %v433 = vld [vmem:[%s1 + $0x48] sm:$0xff]
  %v434 = vld [vmem:[%s1 + $0x50] sm:$0xff]
  %v435 = vld [vmem:[%s1 + $0x58] sm:$0xff]
  %v436 = vld [vmem:[%s1 + $0x60] sm:$0xff]
  %v437 = vld [vmem:[%s1 + $0x68] sm:$0xff]
  %v438 = vld [vmem:[%s1 + $0x70] sm:$0xff]
  %v439 = vld [vmem:[%s1 + $0x78] sm:$0xff]
  %v440 = vld [vmem:[%s1 + $0x80] sm:$0xff]
  %v441 = vld [vmem:[%s1 + $0x88] sm:$0xff]
  %v442 = vld [vmem:[%s1 + $0x90] sm:$0xff]
  %v443 = vld [vmem:[%s1 + $0x98] sm:$0xff]
  %v444 = vld [vmem:[%s1 + $0xa0] sm:$0xff]
  %v445 = vld [vmem:[%s1 + $0xa8] sm:$0xff]
  %v446 = vld [vmem:[%s1 + $0xb0] sm:$0xff]
  %v447 = vld [vmem:[%s1 + $0xb8] sm:$0xff]
  %v448 = vld [vmem:[%s1 + $0xc0] sm:$0xff]
  %v449 = vld [vmem:[%s1 + $0xc8] sm:$0xff]
  %v450 = vld [vmem:[%s1 + $0xd0] sm:$0xff]
  %v451 = vld [vmem:[%s1 + $0xd8] sm:$0xff]
  %v452 = vld [vmem:[%s1 + $0xe0] sm:$0xff]
  %v453 = vld [vmem:[%s1 + $0xe8] sm:$0xff]
  %v454 = vld [vmem:[%s1 + $0xf0] sm:$0xff]
  %v455 = vld [vmem:[%s1 + $0xf8] sm:$0xff]
  %v456 = vld [vmem:[%s1 + $0x100] sm:$0xff]
  %v457 = vld [vmem:[%s1 + $0x108] sm:$0xff]
  %v458 = vld [vmem:[%s1 + $0x110] sm:$0xff]
  %v459 = vld [vmem:[%s1 + $0x118] sm:$0xff]
  %v461 = vsel %vm70, %v424, 0
  %v464 = vsel %vm70, %v425, 0
  %v467 = vsel %vm70, %v426, 0
  %v470 = vsel %vm70, %v427, 0
  %v473 = vsel %vm70, %v428, 0
  %v476 = vsel %vm70, %v429, 0
  %v479 = vsel %vm70, %v430, 0
  %v482 = vsel %vm70, %v431, 0
  %v485 = vsel %vm70, %v432, 0
  %v488 = vsel %vm70, %v433, 0
  %v491 = vsel %vm70, %v434, 0
  %v494 = vsel %vm70, %v435, 0
  %v497 = vsel %vm70, %v436, 0
  %v500 = vsel %vm70, %v437, 0
  %v503 = vsel %vm70, %v438, 0
  %v506 = vsel %vm70, %v439, 0
  %v509 = vsel %vm70, %v440, 0
  %v512 = vsel %vm70, %v441, 0
  %v515 = vsel %vm70, %v442, 0
  %v518 = vsel %vm70, %v443, 0
  %v521 = vsel %vm70, %v444, 0
  %v524 = vsel %vm70, %v445, 0
  %v527 = vsel %vm70, %v446, 0
  %v530 = vsel %vm70, %v447, 0
  %v533 = vsel %vm70, %v448, 0
  %v536 = vsel %vm70, %v449, 0
  %v539 = vsel %vm70, %v450, 0
  %v542 = vsel %vm70, %v451, 0
  %v545 = vsel %vm70, %v452, 0
  %v548 = vsel %vm70, %v453, 0
  %v551 = vsel %vm70, %v454, 0
  %v554 = vsel %vm70, %v455, 0
  %v557 = vsel %vm70, %v456, 0
  %v560 = vsel %vm70, %v457, 0
  %v563 = vsel %vm70, %v458, 0
  %v566 = vsel %vm70, %v459, 0
  %568 = vmatprep.subr.mxu0 0.0
  %569 = vmatpush1.msra.mxu0 0.0
  %570 = vmatprep.subr.mxu0 0.0
  %571 = vmatpush1.msra.mxu0 0.0
  %572 = vmatprep.subr.mxu0 0.0
  %573 = vmatpush1.msra.mxu0 0.0
  %574 = vmatprep.subr.mxu0 0.0
  %575 = vmatpush1.msra.mxu0 0.0
  %576 = vmatprep.subr.mxu0 0.0
  %577 = vmatpush1.msra.mxu0 0.0
  %578 = vmatprep.subr.mxu0 0.0
  %579 = vmatpush1.msra.mxu0 0.0
  %580 = vmatprep.subr.mxu0 0.0
  %581 = vmatpush1.msra.mxu0 0.0
  %582 = vmatprep.subr.mxu0 0.0
  %583 = vmatpush1.msra.mxu0 0.0
  %584 = vmatprep.subr.mxu0 0.0
  %585 = vmatpush1.msra.mxu0 0.0
  %586 = vmatprep.subr.mxu0 0.0
  %587 = vmatpush1.msra.mxu0 0.0
  %588 = vmatprep.subr.mxu0 0.0
  %589 = vmatpush1.msra.mxu0 0.0
  %590 = vmatprep.subr.mxu0 0.0
  %591 = vmatpush1.msra.mxu0 0.0
  %592 = vmatprep.subr.mxu0 0.0
  %593 = vmatpush1.msra.mxu0 %v26
  %594 = vmatprep.subr.mxu0 0.0
  %595 = vmatpush1.msra.mxu0 %v25
  %596 = vmatprep.subr.mxu0 0.0
  %597 = vmatpush1.msra.mxu0 %v24
  %598 = vmatprep.subr.mxu0 0.0
  %599 = vmatpush1.msra.mxu0 %v23
  %600 = vmatprep.subr.mxu0 0.0
  %601 = vmatpush2.msra.mxu0 0.0
  %602 = vmatprep.subr.mxu0 0.0
  %603 = vmatpush2.msra.mxu0 0.0
  %604 = vmatprep.subr.mxu0 0.0
  %605 = vmatpush2.msra.mxu0 0.0
  %606 = vmatprep.subr.mxu0 0.0
  %607 = vmatpush2.msra.mxu0 0.0
  %608 = vmatprep.subr.mxu0 0.0
  %609 = vmatpush2.msra.mxu0 0.0
  %610 = vmatprep.subr.mxu0 0.0
  %611 = vmatpush2.msra.mxu0 0.0
  %612 = vmatprep.subr.mxu0 0.0
  %613 = vmatpush2.msra.mxu0 0.0
  %614 = vmatprep.subr.mxu0 0.0
  %615 = vmatpush2.msra.mxu0 0.0
  %616 = vmatprep.subr.mxu0 0.0
  %617 = vmatpush2.msra.mxu0 0.0
  %618 = vmatprep.subr.mxu0 0.0
  %619 = vmatpush2.msra.mxu0 0.0
  %620 = vmatprep.subr.mxu0 0.0
  %621 = vmatpush2.msra.mxu0 0.0
  %622 = vmatprep.subr.mxu0 0.0
  %623 = vmatpush2.msra.mxu0 0.0
  %624 = vmatprep.subr.mxu0 0.0
  %625 = vmatpush2.msra.mxu0 0.0
  %626 = vmatprep.subr.mxu0 0.0
  %627 = vmatpush2.msra.mxu0 0.0
  %628 = vmatprep.subr.mxu0 0.0
  %629 = vmatpush2.msra.mxu0 0.0
  %630 = vmatprep.subr.mxu0 0.0
  %631 = vmatpush2.msra.mxu0 0.0
  %632 = vmatprep.mubr.f32.mxu0 0.0
  %633 = vmatmul.mubr.f32.gmra.mxu0 %v461
  %v634 = vpop.f32.mrf.mxu0
  %v635 = vadd.f32 %v68, %v634
  %v636 = vpop.f32.mrf.mxu0
  %637 = vmatprep.mubr.f32.mxu0 0.0
  %638 = vmatmul.mubr.f32.gmra.mxu0 %v464
  %v639 = vpop.f32.mrf.mxu0
  %v640 = vadd.f32 %v68, %v639
  %v641 = vpop.f32.mrf.mxu0
  %642 = vmatprep.mubr.f32.mxu0 0.0
  %643 = vmatmul.mubr.f32.gmra.mxu0 %v467
  %v644 = vpop.f32.mrf.mxu0
  %v645 = vadd.f32 %v68, %v644
  %v646 = vpop.f32.mrf.mxu0
  %647 = vmatprep.mubr.f32.mxu0 0.0
  %648 = vmatmul.mubr.f32.gmra.mxu0 %v470
  %v649 = vpop.f32.mrf.mxu0
  %v650 = vadd.f32 %v68, %v649
  %v651 = vpop.f32.mrf.mxu0
  %652 = vmatprep.mubr.f32.mxu0 0.0
  %653 = vmatmul.mubr.f32.gmra.mxu0 %v473
  %v654 = vpop.f32.mrf.mxu0
  %v655 = vadd.f32 %v68, %v654
  %v656 = vpop.f32.mrf.mxu0
  %657 = vmatprep.mubr.f32.mxu0 0.0
  %658 = vmatmul.mubr.f32.gmra.mxu0 %v476
  %v659 = vpop.f32.mrf.mxu0
  %v660 = vadd.f32 %v68, %v659
  %v661 = vpop.f32.mrf.mxu0
  %662 = vmatprep.mubr.f32.mxu0 0.0
  %663 = vmatmul.mubr.f32.gmra.mxu0 %v479
  %v664 = vpop.f32.mrf.mxu0
  %v665 = vadd.f32 %v68, %v664
  %v666 = vpop.f32.mrf.mxu0
  %667 = vmatprep.mubr.f32.mxu0 0.0
  %668 = vmatmul.mubr.f32.gmra.mxu0 %v482
  %v669 = vpop.f32.mrf.mxu0
  %v670 = vadd.f32 %v68, %v669
  %v671 = vpop.f32.mrf.mxu0
  %672 = vmatprep.mubr.f32.mxu0 0.0
  %673 = vmatmul.mubr.f32.gmra.mxu0 %v485
  %v674 = vpop.f32.mrf.mxu0
  %v675 = vadd.f32 %v68, %v674
  %v676 = vpop.f32.mrf.mxu0
  %677 = vmatprep.mubr.f32.mxu0 0.0
  %678 = vmatmul.mubr.f32.gmra.mxu0 %v488
  %v679 = vpop.f32.mrf.mxu0
  %v680 = vadd.f32 %v68, %v679
  %v681 = vpop.f32.mrf.mxu0
  %682 = vmatprep.mubr.f32.mxu0 0.0
  %683 = vmatmul.mubr.f32.gmra.mxu0 %v491
  %v684 = vpop.f32.mrf.mxu0
  %v685 = vadd.f32 %v68, %v684
  %v686 = vpop.f32.mrf.mxu0
  %687 = vmatprep.mubr.f32.mxu0 0.0
  %688 = vmatmul.mubr.f32.gmra.mxu0 %v494
  %v689 = vpop.f32.mrf.mxu0
  %v690 = vadd.f32 %v68, %v689
  %v691 = vpop.f32.mrf.mxu0
  %692 = vmatprep.mubr.f32.mxu0 0.0
  %693 = vmatmul.mubr.f32.gmra.mxu0 %v497
  %v694 = vpop.f32.mrf.mxu0
  %v695 = vadd.f32 %v68, %v694
  %v696 = vpop.f32.mrf.mxu0
  %697 = vmatprep.mubr.f32.mxu0 0.0
  %698 = vmatmul.mubr.f32.gmra.mxu0 %v500
  %v699 = vpop.f32.mrf.mxu0
  %v700 = vadd.f32 %v68, %v699
  %v701 = vpop.f32.mrf.mxu0
  %702 = vmatprep.mubr.f32.mxu0 0.0
  %703 = vmatmul.mubr.f32.gmra.mxu0 %v503
  %v704 = vpop.f32.mrf.mxu0
  %v705 = vadd.f32 %v68, %v704
  %v706 = vpop.f32.mrf.mxu0
  %707 = vmatprep.mubr.f32.mxu0 0.0
  %708 = vmatmul.mubr.f32.gmra.mxu0 %v506
  %v709 = vpop.f32.mrf.mxu0
  %v710 = vadd.f32 %v68, %v709
  %v711 = vpop.f32.mrf.mxu0
  %712 = vmatprep.mubr.f32.mxu0 0.0
  %713 = vmatmul.mubr.f32.gmra.mxu0 %v509
  %v714 = vpop.f32.mrf.mxu0
  %v715 = vadd.f32 %v68, %v714
  %v716 = vpop.f32.mrf.mxu0
  %717 = vmatprep.mubr.f32.mxu0 0.0
  %718 = vmatmul.mubr.f32.gmra.mxu0 %v512
  %v719 = vpop.f32.mrf.mxu0
  %v720 = vadd.f32 %v68, %v719
  %v721 = vpop.f32.mrf.mxu0
  %722 = vmatprep.mubr.f32.mxu0 0.0
  %723 = vmatmul.mubr.f32.gmra.mxu0 %v515
  %v724 = vpop.f32.mrf.mxu0
  %v725 = vadd.f32 %v68, %v724
  %v726 = vpop.f32.mrf.mxu0
  %727 = vmatprep.mubr.f32.mxu0 0.0
  %728 = vmatmul.mubr.f32.gmra.mxu0 %v518
  %v729 = vpop.f32.mrf.mxu0
  %v730 = vadd.f32 %v68, %v729
  %v731 = vpop.f32.mrf.mxu0
  %732 = vmatprep.mubr.f32.mxu0 0.0
  %733 = vmatmul.mubr.f32.gmra.mxu0 %v521
  %v734 = vpop.f32.mrf.mxu0
  %v735 = vadd.f32 %v68, %v734
  %v736 = vpop.f32.mrf.mxu0
  %737 = vmatprep.mubr.f32.mxu0 0.0
  %738 = vmatmul.mubr.f32.gmra.mxu0 %v524
  %v739 = vpop.f32.mrf.mxu0
  %v740 = vadd.f32 %v68, %v739
  %v741 = vpop.f32.mrf.mxu0
  %742 = vmatprep.mubr.f32.mxu0 0.0
  %743 = vmatmul.mubr.f32.gmra.mxu0 %v527
  %v744 = vpop.f32.mrf.mxu0
  %v745 = vadd.f32 %v68, %v744
  %v746 = vpop.f32.mrf.mxu0
  %747 = vmatprep.mubr.f32.mxu0 0.0
  %748 = vmatmul.mubr.f32.gmra.mxu0 %v530
  %v749 = vpop.f32.mrf.mxu0
  %v750 = vadd.f32 %v68, %v749
  %v751 = vpop.f32.mrf.mxu0
  %752 = vmatprep.mubr.f32.mxu0 0.0
  %753 = vmatmul.mubr.f32.gmra.mxu0 %v533
  %v754 = vpop.f32.mrf.mxu0
  %v755 = vadd.f32 %v68, %v754
  %v756 = vpop.f32.mrf.mxu0
  %757 = vmatprep.mubr.f32.mxu0 0.0
  %758 = vmatmul.mubr.f32.gmra.mxu0 %v536
  %v759 = vpop.f32.mrf.mxu0
  %v760 = vadd.f32 %v68, %v759
  %v761 = vpop.f32.mrf.mxu0
  %762 = vmatprep.mubr.f32.mxu0 0.0
  %763 = vmatmul.mubr.f32.gmra.mxu0 %v539
  %v764 = vpop.f32.mrf.mxu0
  %v765 = vadd.f32 %v68, %v764
  %v766 = vpop.f32.mrf.mxu0
  %767 = vmatprep.mubr.f32.mxu0 0.0
  %768 = vmatmul.mubr.f32.gmra.mxu0 %v542
  %v769 = vpop.f32.mrf.mxu0
  %v770 = vadd.f32 %v68, %v769
  %v771 = vpop.f32.mrf.mxu0
  %772 = vmatprep.mubr.f32.mxu0 0.0
  %773 = vmatmul.mubr.f32.gmra.mxu0 %v545
  %v774 = vpop.f32.mrf.mxu0
  %v775 = vadd.f32 %v68, %v774
  %v776 = vpop.f32.mrf.mxu0
  %777 = vmatprep.mubr.f32.mxu0 0.0
  %778 = vmatmul.mubr.f32.gmra.mxu0 %v548
  %v779 = vpop.f32.mrf.mxu0
  %v780 = vadd.f32 %v68, %v779
  %v781 = vpop.f32.mrf.mxu0
  %782 = vmatprep.mubr.f32.mxu0 0.0
  %783 = vmatmul.mubr.f32.gmra.mxu0 %v551
  %v784 = vpop.f32.mrf.mxu0
  %v785 = vadd.f32 %v68, %v784
  %v786 = vpop.f32.mrf.mxu0
  %787 = vmatprep.mubr.f32.mxu0 0.0
  %788 = vmatmul.mubr.f32.gmra.mxu0 %v554
  %v789 = vpop.f32.mrf.mxu0
  %v790 = vadd.f32 %v68, %v789
  %v791 = vpop.f32.mrf.mxu0
  %792 = vmatprep.mubr.f32.mxu0 0.0
  %793 = vmatmul.mubr.f32.gmra.mxu0 %v557
  %v794 = vpop.f32.mrf.mxu0
  %v795 = vadd.f32 %v68, %v794
  %v796 = vpop.f32.mrf.mxu0
  %797 = vmatprep.mubr.f32.mxu0 0.0
  %798 = vmatmul.mubr.f32.gmra.mxu0 %v560
  %v799 = vpop.f32.mrf.mxu0
  %v800 = vadd.f32 %v68, %v799
  %v801 = vpop.f32.mrf.mxu0
  %802 = vmatprep.mubr.f32.mxu0 0.0
  %803 = vmatmul.mubr.f32.gmra.mxu0 %v563
  %v804 = vpop.f32.mrf.mxu0
  %v805 = vadd.f32 %v68, %v804
  %v806 = vpop.f32.mrf.mxu0
  %807 = vmatprep.mubr.f32.mxu0 0.0
  %808 = vmatmul.mubr.f32.gmra.mxu0 %v566
  %v809 = vpop.f32.mrf.mxu0
  %v810 = vadd.f32 %v68, %v809
  %v811 = vpop.f32.mrf.mxu0
  %812 = vdwg.mxu0
  %v813 = vmax.f32 %v246, %v635
  %v814 = vmax.f32 %v251, %v640
  %v815 = vmax.f32 %v256, %v645
  %v816 = vmax.f32 %v261, %v650
  %v817 = vmax.f32 %v266, %v655
  %v818 = vmax.f32 %v271, %v660
  %v819 = vmax.f32 %v276, %v665
  %v820 = vmax.f32 %v281, %v670
  %v821 = vmax.f32 %v286, %v675
  %v822 = vmax.f32 %v291, %v680
  %v823 = vmax.f32 %v296, %v685
  %v824 = vmax.f32 %v301, %v690
  %v825 = vmax.f32 %v306, %v695
  %v826 = vmax.f32 %v311, %v700
  %v827 = vmax.f32 %v316, %v705
  %v828 = vmax.f32 %v321, %v710
  %v829 = vmax.f32 %v326, %v715
  %v830 = vmax.f32 %v331, %v720
  %v831 = vmax.f32 %v336, %v725
  %v832 = vmax.f32 %v341, %v730
  %v833 = vmax.f32 %v346, %v735
  %v834 = vmax.f32 %v351, %v740
  %v835 = vmax.f32 %v356, %v745
  %v836 = vmax.f32 %v361, %v750
  %v837 = vmax.f32 %v366, %v755
  %v838 = vmax.f32 %v371, %v760
  %v839 = vmax.f32 %v376, %v765
  %v840 = vmax.f32 %v381, %v770
  %v841 = vmax.f32 %v386, %v775
  %v842 = vmax.f32 %v391, %v780
  %v843 = vmax.f32 %v396, %v785
  %v844 = vmax.f32 %v401, %v790
  %v845 = vmax.f32 %v406, %v795
  %v846 = vmax.f32 %v411, %v800
  %v847 = vmax.f32 %v416, %v805
  %v848 = vmax.f32 %v421, %v810
  %v849 = vld [vmem:[%s2] sm:$0xff]
  %v850 = vld [vmem:[%s2 + $0x8] sm:$0xff]
  %v851 = vld [vmem:[%s2 + $0x10] sm:$0xff]
  %v852 = vld [vmem:[%s2 + $0x18] sm:$0xff]
  %v853 = vld [vmem:[%s2 + $0x20] sm:$0xff]
  %v854 = vld [vmem:[%s2 + $0x28] sm:$0xff]
  %v855 = vld [vmem:[%s2 + $0x30] sm:$0xff]
  %v856 = vld [vmem:[%s2 + $0x38] sm:$0xff]
  %v857 = vld [vmem:[%s2 + $0x40] sm:$0xff]
  %v858 = vld [vmem:[%s2 + $0x48] sm:$0xff]
  %v859 = vld [vmem:[%s2 + $0x50] sm:$0xff]
  %v860 = vld [vmem:[%s2 + $0x58] sm:$0xff]
  %v861 = vld [vmem:[%s2 + $0x60] sm:$0xff]
  %v862 = vld [vmem:[%s2 + $0x68] sm:$0xff]
  %v863 = vld [vmem:[%s2 + $0x70] sm:$0xff]
  %v864 = vld [vmem:[%s2 + $0x78] sm:$0xff]
  %v865 = vld [vmem:[%s2 + $0x80] sm:$0xff]
  %v866 = vld [vmem:[%s2 + $0x88] sm:$0xff]
  %v867 = vld [vmem:[%s2 + $0x90] sm:$0xff]
  %v868 = vld [vmem:[%s2 + $0x98] sm:$0xff]
  %v869 = vld [vmem:[%s2 + $0xa0] sm:$0xff]
  %v870 = vld [vmem:[%s2 + $0xa8] sm:$0xff]
  %v871 = vld [vmem:[%s2 + $0xb0] sm:$0xff]
  %v872 = vld [vmem:[%s2 + $0xb8] sm:$0xff]
  %v873 = vld [vmem:[%s2 + $0xc0] sm:$0xff]
  %v874 = vld [vmem:[%s2 + $0xc8] sm:$0xff]
  %v875 = vld [vmem:[%s2 + $0xd0] sm:$0xff]
  %v876 = vld [vmem:[%s2 + $0xd8] sm:$0xff]
  %v877 = vld [vmem:[%s2 + $0xe0] sm:$0xff]
  %v878 = vld [vmem:[%s2 + $0xe8] sm:$0xff]
  %v879 = vld [vmem:[%s2 + $0xf0] sm:$0xff]
  %v880 = vld [vmem:[%s2 + $0xf8] sm:$0xff]
  %v881 = vld [vmem:[%s2 + $0x100] sm:$0xff]
  %v882 = vld [vmem:[%s2 + $0x108] sm:$0xff]
  %v883 = vld [vmem:[%s2 + $0x110] sm:$0xff]
  %v884 = vld [vmem:[%s2 + $0x118] sm:$0xff]
  %v886 = vsel %vm70, %v849, 0
  %v889 = vsel %vm70, %v850, 0
  %v892 = vsel %vm70, %v851, 0
  %v895 = vsel %vm70, %v852, 0
  %v898 = vsel %vm70, %v853, 0
  %v901 = vsel %vm70, %v854, 0
  %v904 = vsel %vm70, %v855, 0
  %v907 = vsel %vm70, %v856, 0
  %v910 = vsel %vm70, %v857, 0
  %v913 = vsel %vm70, %v858, 0
  %v916 = vsel %vm70, %v859, 0
  %v919 = vsel %vm70, %v860, 0
  %v922 = vsel %vm70, %v861, 0
  %v925 = vsel %vm70, %v862, 0
  %v928 = vsel %vm70, %v863, 0
  %v931 = vsel %vm70, %v864, 0
  %v934 = vsel %vm70, %v865, 0
  %v937 = vsel %vm70, %v866, 0
  %v940 = vsel %vm70, %v867, 0
  %v943 = vsel %vm70, %v868, 0
  %v946 = vsel %vm70, %v869, 0
  %v949 = vsel %vm70, %v870, 0
  %v952 = vsel %vm70, %v871, 0
  %v955 = vsel %vm70, %v872, 0
  %v958 = vsel %vm70, %v873, 0
  %v961 = vsel %vm70, %v874, 0
  %v964 = vsel %vm70, %v875, 0
  %v967 = vsel %vm70, %v876, 0
  %v970 = vsel %vm70, %v877, 0
  %v973 = vsel %vm70, %v878, 0
  %v976 = vsel %vm70, %v879, 0
  %v979 = vsel %vm70, %v880, 0
  %v982 = vsel %vm70, %v881, 0
  %v985 = vsel %vm70, %v882, 0
  %v988 = vsel %vm70, %v883, 0
  %v991 = vsel %vm70, %v884, 0
  %993 = vmatprep.subr.mxu0 0.0
  %994 = vmatpush1.msra.mxu0 0.0
  %995 = vmatprep.subr.mxu0 0.0
  %996 = vmatpush1.msra.mxu0 0.0
  %997 = vmatprep.subr.mxu0 0.0
  %998 = vmatpush1.msra.mxu0 0.0
  %999 = vmatprep.subr.mxu0 0.0
  %1000 = vmatpush1.msra.mxu0 0.0
  %1001 = vmatprep.subr.mxu0 0.0
  %1002 = vmatpush1.msra.mxu0 0.0
  %1003 = vmatprep.subr.mxu0 0.0
  %1004 = vmatpush1.msra.mxu0 0.0
  %1005 = vmatprep.subr.mxu0 0.0
  %1006 = vmatpush1.msra.mxu0 0.0
  %1007 = vmatprep.subr.mxu0 0.0
  %1008 = vmatpush1.msra.mxu0 0.0
  %1009 = vmatprep.subr.mxu0 0.0
  %1010 = vmatpush1.msra.mxu0 0.0
  %1011 = vmatprep.subr.mxu0 0.0
  %1012 = vmatpush1.msra.mxu0 0.0
  %1013 = vmatprep.subr.mxu0 0.0
  %1014 = vmatpush1.msra.mxu0 0.0
  %1015 = vmatprep.subr.mxu0 0.0
  %1016 = vmatpush1.msra.mxu0 0.0
  %1017 = vmatprep.subr.mxu0 0.0
  %1018 = vmatpush1.msra.mxu0 %v26
  %1019 = vmatprep.subr.mxu0 0.0
  %1020 = vmatpush1.msra.mxu0 %v25
  %1021 = vmatprep.subr.mxu0 0.0
  %1022 = vmatpush1.msra.mxu0 %v24
  %1023 = vmatprep.subr.mxu0 0.0
  %1024 = vmatpush1.msra.mxu0 %v23
  %1025 = vmatprep.subr.mxu0 0.0
  %1026 = vmatpush2.msra.mxu0 0.0
  %1027 = vmatprep.subr.mxu0 0.0
  %1028 = vmatpush2.msra.mxu0 0.0
  %1029 = vmatprep.subr.mxu0 0.0
  %1030 = vmatpush2.msra.mxu0 0.0
  %1031 = vmatprep.subr.mxu0 0.0
  %1032 = vmatpush2.msra.mxu0 0.0
  %1033 = vmatprep.subr.mxu0 0.0
  %1034 = vmatpush2.msra.mxu0 0.0
  %1035 = vmatprep.subr.mxu0 0.0
  %1036 = vmatpush2.msra.mxu0 0.0
  %1037 = vmatprep.subr.mxu0 0.0
  %1038 = vmatpush2.msra.mxu0 0.0
  %1039 = vmatprep.subr.mxu0 0.0
  %1040 = vmatpush2.msra.mxu0 0.0
  %1041 = vmatprep.subr.mxu0 0.0
  %1042 = vmatpush2.msra.mxu0 0.0
  %1043 = vmatprep.subr.mxu0 0.0
  %1044 = vmatpush2.msra.mxu0 0.0
  %1045 = vmatprep.subr.mxu0 0.0
  %1046 = vmatpush2.msra.mxu0 0.0
  %1047 = vmatprep.subr.mxu0 0.0
  %1048 = vmatpush2.msra.mxu0 0.0
  %1049 = vmatprep.subr.mxu0 0.0
  %1050 = vmatpush2.msra.mxu0 0.0
  %1051 = vmatprep.subr.mxu0 0.0
  %1052 = vmatpush2.msra.mxu0 0.0
  %1053 = vmatprep.subr.mxu0 0.0
  %1054 = vmatpush2.msra.mxu0 0.0
  %1055 = vmatprep.subr.mxu0 0.0
  %1056 = vmatpush2.msra.mxu0 0.0
  %1057 = vmatprep.mubr.f32.mxu0 0.0
  %1058 = vmatmul.mubr.f32.gmra.mxu0 %v886
  %v1059 = vpop.f32.mrf.mxu0
  %v1060 = vadd.f32 %v68, %v1059
  %v1061 = vpop.f32.mrf.mxu0
  %1062 = vmatprep.mubr.f32.mxu0 0.0
  %1063 = vmatmul.mubr.f32.gmra.mxu0 %v889
  %v1064 = vpop.f32.mrf.mxu0
  %v1065 = vadd.f32 %v68, %v1064
  %v1066 = vpop.f32.mrf.mxu0
  %1067 = vmatprep.mubr.f32.mxu0 0.0
  %1068 = vmatmul.mubr.f32.gmra.mxu0 %v892
  %v1069 = vpop.f32.mrf.mxu0
  %v1070 = vadd.f32 %v68, %v1069
  %v1071 = vpop.f32.mrf.mxu0
  %1072 = vmatprep.mubr.f32.mxu0 0.0
  %1073 = vmatmul.mubr.f32.gmra.mxu0 %v895
  %v1074 = vpop.f32.mrf.mxu0
  %v1075 = vadd.f32 %v68, %v1074
  %v1076 = vpop.f32.mrf.mxu0
  %1077 = vmatprep.mubr.f32.mxu0 0.0
  %1078 = vmatmul.mubr.f32.gmra.mxu0 %v898
  %v1079 = vpop.f32.mrf.mxu0
  %v1080 = vadd.f32 %v68, %v1079
  %v1081 = vpop.f32.mrf.mxu0
  %1082 = vmatprep.mubr.f32.mxu0 0.0
  %1083 = vmatmul.mubr.f32.gmra.mxu0 %v901
  %v1084 = vpop.f32.mrf.mxu0
  %v1085 = vadd.f32 %v68, %v1084
  %v1086 = vpop.f32.mrf.mxu0
  %1087 = vmatprep.mubr.f32.mxu0 0.0
  %1088 = vmatmul.mubr.f32.gmra.mxu0 %v904
  %v1089 = vpop.f32.mrf.mxu0
  %v1090 = vadd.f32 %v68, %v1089
  %v1091 = vpop.f32.mrf.mxu0
  %1092 = vmatprep.mubr.f32.mxu0 0.0
  %1093 = vmatmul.mubr.f32.gmra.mxu0 %v907
  %v1094 = vpop.f32.mrf.mxu0
  %v1095 = vadd.f32 %v68, %v1094
  %v1096 = vpop.f32.mrf.mxu0
  %1097 = vmatprep.mubr.f32.mxu0 0.0
  %1098 = vmatmul.mubr.f32.gmra.mxu0 %v910
  %v1099 = vpop.f32.mrf.mxu0
  %v1100 = vadd.f32 %v68, %v1099
  %v1101 = vpop.f32.mrf.mxu0
  %1102 = vmatprep.mubr.f32.mxu0 0.0
  %1103 = vmatmul.mubr.f32.gmra.mxu0 %v913
  %v1104 = vpop.f32.mrf.mxu0
  %v1105 = vadd.f32 %v68, %v1104
  %v1106 = vpop.f32.mrf.mxu0
  %1107 = vmatprep.mubr.f32.mxu0 0.0
  %1108 = vmatmul.mubr.f32.gmra.mxu0 %v916
  %v1109 = vpop.f32.mrf.mxu0
  %v1110 = vadd.f32 %v68, %v1109
  %v1111 = vpop.f32.mrf.mxu0
  %1112 = vmatprep.mubr.f32.mxu0 0.0
  %1113 = vmatmul.mubr.f32.gmra.mxu0 %v919
  %v1114 = vpop.f32.mrf.mxu0
  %v1115 = vadd.f32 %v68, %v1114
  %v1116 = vpop.f32.mrf.mxu0
  %1117 = vmatprep.mubr.f32.mxu0 0.0
  %1118 = vmatmul.mubr.f32.gmra.mxu0 %v922
  %v1119 = vpop.f32.mrf.mxu0
  %v1120 = vadd.f32 %v68, %v1119
  %v1121 = vpop.f32.mrf.mxu0
  %1122 = vmatprep.mubr.f32.mxu0 0.0
  %1123 = vmatmul.mubr.f32.gmra.mxu0 %v925
  %v1124 = vpop.f32.mrf.mxu0
  %v1125 = vadd.f32 %v68, %v1124
  %v1126 = vpop.f32.mrf.mxu0
  %1127 = vmatprep.mubr.f32.mxu0 0.0
  %1128 = vmatmul.mubr.f32.gmra.mxu0 %v928
  %v1129 = vpop.f32.mrf.mxu0
  %v1130 = vadd.f32 %v68, %v1129
  %v1131 = vpop.f32.mrf.mxu0
  %1132 = vmatprep.mubr.f32.mxu0 0.0
  %1133 = vmatmul.mubr.f32.gmra.mxu0 %v931
  %v1134 = vpop.f32.mrf.mxu0
  %v1135 = vadd.f32 %v68, %v1134
  %v1136 = vpop.f32.mrf.mxu0
  %1137 = vmatprep.mubr.f32.mxu0 0.0
  %1138 = vmatmul.mubr.f32.gmra.mxu0 %v934
  %v1139 = vpop.f32.mrf.mxu0
  %v1140 = vadd.f32 %v68, %v1139
  %v1141 = vpop.f32.mrf.mxu0
  %1142 = vmatprep.mubr.f32.mxu0 0.0
  %1143 = vmatmul.mubr.f32.gmra.mxu0 %v937
  %v1144 = vpop.f32.mrf.mxu0
  %v1145 = vadd.f32 %v68, %v1144
  %v1146 = vpop.f32.mrf.mxu0
  %1147 = vmatprep.mubr.f32.mxu0 0.0
  %1148 = vmatmul.mubr.f32.gmra.mxu0 %v940
  %v1149 = vpop.f32.mrf.mxu0
  %v1150 = vadd.f32 %v68, %v1149
  %v1151 = vpop.f32.mrf.mxu0
  %1152 = vmatprep.mubr.f32.mxu0 0.0
  %1153 = vmatmul.mubr.f32.gmra.mxu0 %v943
  %v1154 = vpop.f32.mrf.mxu0
  %v1155 = vadd.f32 %v68, %v1154
  %v1156 = vpop.f32.mrf.mxu0
  %1157 = vmatprep.mubr.f32.mxu0 0.0
  %1158 = vmatmul.mubr.f32.gmra.mxu0 %v946
  %v1159 = vpop.f32.mrf.mxu0
  %v1160 = vadd.f32 %v68, %v1159
  %v1161 = vpop.f32.mrf.mxu0
  %1162 = vmatprep.mubr.f32.mxu0 0.0
  %1163 = vmatmul.mubr.f32.gmra.mxu0 %v949
  %v1164 = vpop.f32.mrf.mxu0
  %v1165 = vadd.f32 %v68, %v1164
  %v1166 = vpop.f32.mrf.mxu0
  %1167 = vmatprep.mubr.f32.mxu0 0.0
  %1168 = vmatmul.mubr.f32.gmra.mxu0 %v952
  %v1169 = vpop.f32.mrf.mxu0
  %v1170 = vadd.f32 %v68, %v1169
  %v1171 = vpop.f32.mrf.mxu0
  %1172 = vmatprep.mubr.f32.mxu0 0.0
  %1173 = vmatmul.mubr.f32.gmra.mxu0 %v955
  %v1174 = vpop.f32.mrf.mxu0
  %v1175 = vadd.f32 %v68, %v1174
  %v1176 = vpop.f32.mrf.mxu0
  %1177 = vmatprep.mubr.f32.mxu0 0.0
  %1178 = vmatmul.mubr.f32.gmra.mxu0 %v958
  %v1179 = vpop.f32.mrf.mxu0
  %v1180 = vadd.f32 %v68, %v1179
  %v1181 = vpop.f32.mrf.mxu0
  %1182 = vmatprep.mubr.f32.mxu0 0.0
  %1183 = vmatmul.mubr.f32.gmra.mxu0 %v961
  %v1184 = vpop.f32.mrf.mxu0
  %v1185 = vadd.f32 %v68, %v1184
  %v1186 = vpop.f32.mrf.mxu0
  %1187 = vmatprep.mubr.f32.mxu0 0.0
  %1188 = vmatmul.mubr.f32.gmra.mxu0 %v964
  %v1189 = vpop.f32.mrf.mxu0
  %v1190 = vadd.f32 %v68, %v1189
  %v1191 = vpop.f32.mrf.mxu0
  %1192 = vmatprep.mubr.f32.mxu0 0.0
  %1193 = vmatmul.mubr.f32.gmra.mxu0 %v967
  %v1194 = vpop.f32.mrf.mxu0
  %v1195 = vadd.f32 %v68, %v1194
  %v1196 = vpop.f32.mrf.mxu0
  %1197 = vmatprep.mubr.f32.mxu0 0.0
  %1198 = vmatmul.mubr.f32.gmra.mxu0 %v970
  %v1199 = vpop.f32.mrf.mxu0
  %v1200 = vadd.f32 %v68, %v1199
  %v1201 = vpop.f32.mrf.mxu0
  %1202 = vmatprep.mubr.f32.mxu0 0.0
  %1203 = vmatmul.mubr.f32.gmra.mxu0 %v973
  %v1204 = vpop.f32.mrf.mxu0
  %v1205 = vadd.f32 %v68, %v1204
  %v1206 = vpop.f32.mrf.mxu0
  %1207 = vmatprep.mubr.f32.mxu0 0.0
  %1208 = vmatmul.mubr.f32.gmra.mxu0 %v976
  %v1209 = vpop.f32.mrf.mxu0
  %v1210 = vadd.f32 %v68, %v1209
  %v1211 = vpop.f32.mrf.mxu0
  %1212 = vmatprep.mubr.f32.mxu0 0.0
  %1213 = vmatmul.mubr.f32.gmra.mxu0 %v979
  %v1214 = vpop.f32.mrf.mxu0
  %v1215 = vadd.f32 %v68, %v1214
  %v1216 = vpop.f32.mrf.mxu0
  %1217 = vmatprep.mubr.f32.mxu0 0.0
  %1218 = vmatmul.mubr.f32.gmra.mxu0 %v982
  %v1219 = vpop.f32.mrf.mxu0
  %v1220 = vadd.f32 %v68, %v1219
  %v1221 = vpop.f32.mrf.mxu0
  %1222 = vmatprep.mubr.f32.mxu0 0.0
  %1223 = vmatmul.mubr.f32.gmra.mxu0 %v985
  %v1224 = vpop.f32.mrf.mxu0
  %v1225 = vadd.f32 %v68, %v1224
  %v1226 = vpop.f32.mrf.mxu0
  %1227 = vmatprep.mubr.f32.mxu0 0.0
  %1228 = vmatmul.mubr.f32.gmra.mxu0 %v988
  %v1229 = vpop.f32.mrf.mxu0
  %v1230 = vadd.f32 %v68, %v1229
  %v1231 = vpop.f32.mrf.mxu0
  %1232 = vmatprep.mubr.f32.mxu0 0.0
  %1233 = vmatmul.mubr.f32.gmra.mxu0 %v991
  %v1234 = vpop.f32.mrf.mxu0
  %v1235 = vadd.f32 %v68, %v1234
  %v1236 = vpop.f32.mrf.mxu0
  %1237 = vdwg.mxu0
  %v1238 = vld [vmem:[%s3] sm:$0xff]
  %v1239 = vld [vmem:[%s3 + $0x8] sm:$0xff]
  %v1240 = vld [vmem:[%s3 + $0x10] sm:$0xff]
  %v1241 = vld [vmem:[%s3 + $0x18] sm:$0xff]
  %v1242 = vld [vmem:[%s3 + $0x20] sm:$0xff]
  %v1243 = vld [vmem:[%s3 + $0x28] sm:$0xff]
  %v1244 = vld [vmem:[%s3 + $0x30] sm:$0xff]
  %v1245 = vld [vmem:[%s3 + $0x38] sm:$0xff]
  %v1246 = vld [vmem:[%s3 + $0x40] sm:$0xff]
  %v1247 = vld [vmem:[%s3 + $0x48] sm:$0xff]
  %v1248 = vld [vmem:[%s3 + $0x50] sm:$0xff]
  %v1249 = vld [vmem:[%s3 + $0x58] sm:$0xff]
  %v1250 = vld [vmem:[%s3 + $0x60] sm:$0xff]
  %v1251 = vld [vmem:[%s3 + $0x68] sm:$0xff]
  %v1252 = vld [vmem:[%s3 + $0x70] sm:$0xff]
  %v1253 = vld [vmem:[%s3 + $0x78] sm:$0xff]
  %v1254 = vld [vmem:[%s3 + $0x80] sm:$0xff]
  %v1255 = vld [vmem:[%s3 + $0x88] sm:$0xff]
  %v1256 = vld [vmem:[%s3 + $0x90] sm:$0xff]
  %v1257 = vld [vmem:[%s3 + $0x98] sm:$0xff]
  %v1258 = vld [vmem:[%s3 + $0xa0] sm:$0xff]
  %v1259 = vld [vmem:[%s3 + $0xa8] sm:$0xff]
  %v1260 = vld [vmem:[%s3 + $0xb0] sm:$0xff]
  %v1261 = vld [vmem:[%s3 + $0xb8] sm:$0xff]
  %v1262 = vld [vmem:[%s3 + $0xc0] sm:$0xff]
  %v1263 = vld [vmem:[%s3 + $0xc8] sm:$0xff]
  %v1264 = vld [vmem:[%s3 + $0xd0] sm:$0xff]
  %v1265 = vld [vmem:[%s3 + $0xd8] sm:$0xff]
  %v1266 = vld [vmem:[%s3 + $0xe0] sm:$0xff]
  %v1267 = vld [vmem:[%s3 + $0xe8] sm:$0xff]
  %v1268 = vld [vmem:[%s3 + $0xf0] sm:$0xff]
  %v1269 = vld [vmem:[%s3 + $0xf8] sm:$0xff]
  %v1270 = vld [vmem:[%s3 + $0x100] sm:$0xff]
  %v1271 = vld [vmem:[%s3 + $0x108] sm:$0xff]
  %v1272 = vld [vmem:[%s3 + $0x110] sm:$0xff]
  %v1273 = vld [vmem:[%s3 + $0x118] sm:$0xff]
  %v1275 = vsel %vm70, %v1238, 0
  %v1278 = vsel %vm70, %v1239, 0
  %v1281 = vsel %vm70, %v1240, 0
  %v1284 = vsel %vm70, %v1241, 0
  %v1287 = vsel %vm70, %v1242, 0
  %v1290 = vsel %vm70, %v1243, 0
  %v1293 = vsel %vm70, %v1244, 0
  %v1296 = vsel %vm70, %v1245, 0
  %v1299 = vsel %vm70, %v1246, 0
  %v1302 = vsel %vm70, %v1247, 0
  %v1305 = vsel %vm70, %v1248, 0
  %v1308 = vsel %vm70, %v1249, 0
  %v1311 = vsel %vm70, %v1250, 0
  %v1314 = vsel %vm70, %v1251, 0
  %v1317 = vsel %vm70, %v1252, 0
  %v1320 = vsel %vm70, %v1253, 0
  %v1323 = vsel %vm70, %v1254, 0
  %v1326 = vsel %vm70, %v1255, 0
  %v1329 = vsel %vm70, %v1256, 0
  %v1332 = vsel %vm70, %v1257, 0
  %v1335 = vsel %vm70, %v1258, 0
  %v1338 = vsel %vm70, %v1259, 0
  %v1341 = vsel %vm70, %v1260, 0
  %v1344 = vsel %vm70, %v1261, 0
  %v1347 = vsel %vm70, %v1262, 0
  %v1350 = vsel %vm70, %v1263, 0
  %v1353 = vsel %vm70, %v1264, 0
  %v1356 = vsel %vm70, %v1265, 0
  %v1359 = vsel %vm70, %v1266, 0
  %v1362 = vsel %vm70, %v1267, 0
  %v1365 = vsel %vm70, %v1268, 0
  %v1368 = vsel %vm70, %v1269, 0
  %v1371 = vsel %vm70, %v1270, 0
  %v1374 = vsel %vm70, %v1271, 0
  %v1377 = vsel %vm70, %v1272, 0
  %v1380 = vsel %vm70, %v1273, 0
  %1382 = vmatprep.subr.mxu0 0.0
  %1383 = vmatpush1.msra.mxu0 0.0
  %1384 = vmatprep.subr.mxu0 0.0
  %1385 = vmatpush1.msra.mxu0 0.0
  %1386 = vmatprep.subr.mxu0 0.0
  %1387 = vmatpush1.msra.mxu0 0.0
  %1388 = vmatprep.subr.mxu0 0.0
  %1389 = vmatpush1.msra.mxu0 0.0
  %1390 = vmatprep.subr.mxu0 0.0
  %1391 = vmatpush1.msra.mxu0 0.0
  %1392 = vmatprep.subr.mxu0 0.0
  %1393 = vmatpush1.msra.mxu0 0.0
  %1394 = vmatprep.subr.mxu0 0.0
  %1395 = vmatpush1.msra.mxu0 0.0
  %1396 = vmatprep.subr.mxu0 0.0
  %1397 = vmatpush1.msra.mxu0 0.0
  %1398 = vmatprep.subr.mxu0 0.0
  %1399 = vmatpush1.msra.mxu0 0.0
  %1400 = vmatprep.subr.mxu0 0.0
  %1401 = vmatpush1.msra.mxu0 0.0
  %1402 = vmatprep.subr.mxu0 0.0
  %1403 = vmatpush1.msra.mxu0 0.0
  %1404 = vmatprep.subr.mxu0 0.0
  %1405 = vmatpush1.msra.mxu0 0.0
  %1406 = vmatprep.subr.mxu0 0.0
  %1407 = vmatpush1.msra.mxu0 %v26
  %1408 = vmatprep.subr.mxu0 0.0
  %1409 = vmatpush1.msra.mxu0 %v25
  %1410 = vmatprep.subr.mxu0 0.0
  %1411 = vmatpush1.msra.mxu0 %v24
  %1412 = vmatprep.subr.mxu0 0.0
  %1413 = vmatpush1.msra.mxu0 %v23
  %1414 = vmatprep.subr.mxu0 0.0
  %1415 = vmatpush2.msra.mxu0 0.0
  %1416 = vmatprep.subr.mxu0 0.0
  %1417 = vmatpush2.msra.mxu0 0.0
  %1418 = vmatprep.subr.mxu0 0.0
  %1419 = vmatpush2.msra.mxu0 0.0
  %1420 = vmatprep.subr.mxu0 0.0
  %1421 = vmatpush2.msra.mxu0 0.0
  %1422 = vmatprep.subr.mxu0 0.0
  %1423 = vmatpush2.msra.mxu0 0.0
  %1424 = vmatprep.subr.mxu0 0.0
  %1425 = vmatpush2.msra.mxu0 0.0
  %1426 = vmatprep.subr.mxu0 0.0
  %1427 = vmatpush2.msra.mxu0 0.0
  %1428 = vmatprep.subr.mxu0 0.0
  %1429 = vmatpush2.msra.mxu0 0.0
  %1430 = vmatprep.subr.mxu0 0.0
  %1431 = vmatpush2.msra.mxu0 0.0
  %1432 = vmatprep.subr.mxu0 0.0
  %1433 = vmatpush2.msra.mxu0 0.0
  %1434 = vmatprep.subr.mxu0 0.0
  %1435 = vmatpush2.msra.mxu0 0.0
  %1436 = vmatprep.subr.mxu0 0.0
  %1437 = vmatpush2.msra.mxu0 0.0
  %1438 = vmatprep.subr.mxu0 0.0
  %1439 = vmatpush2.msra.mxu0 0.0
  %1440 = vmatprep.subr.mxu0 0.0
  %1441 = vmatpush2.msra.mxu0 0.0
  %1442 = vmatprep.subr.mxu0 0.0
  %1443 = vmatpush2.msra.mxu0 0.0
  %1444 = vmatprep.subr.mxu0 0.0
  %1445 = vmatpush2.msra.mxu0 0.0
  %1446 = vmatprep.mubr.f32.mxu0 0.0
  %1447 = vmatmul.mubr.f32.gmra.mxu0 %v1275
  %v1448 = vpop.f32.mrf.mxu0
  %v1449 = vadd.f32 %v68, %v1448
  %v1450 = vpop.f32.mrf.mxu0
  %1451 = vmatprep.mubr.f32.mxu0 0.0
  %1452 = vmatmul.mubr.f32.gmra.mxu0 %v1278
  %v1453 = vpop.f32.mrf.mxu0
  %v1454 = vadd.f32 %v68, %v1453
  %v1455 = vpop.f32.mrf.mxu0
  %1456 = vmatprep.mubr.f32.mxu0 0.0
  %1457 = vmatmul.mubr.f32.gmra.mxu0 %v1281
  %v1458 = vpop.f32.mrf.mxu0
  %v1459 = vadd.f32 %v68, %v1458
  %v1460 = vpop.f32.mrf.mxu0
  %1461 = vmatprep.mubr.f32.mxu0 0.0
  %1462 = vmatmul.mubr.f32.gmra.mxu0 %v1284
  %v1463 = vpop.f32.mrf.mxu0
  %v1464 = vadd.f32 %v68, %v1463
  %v1465 = vpop.f32.mrf.mxu0
  %1466 = vmatprep.mubr.f32.mxu0 0.0
  %1467 = vmatmul.mubr.f32.gmra.mxu0 %v1287
  %v1468 = vpop.f32.mrf.mxu0
  %v1469 = vadd.f32 %v68, %v1468
  %v1470 = vpop.f32.mrf.mxu0
  %1471 = vmatprep.mubr.f32.mxu0 0.0
  %1472 = vmatmul.mubr.f32.gmra.mxu0 %v1290
  %v1473 = vpop.f32.mrf.mxu0
  %v1474 = vadd.f32 %v68, %v1473
  %v1475 = vpop.f32.mrf.mxu0
  %1476 = vmatprep.mubr.f32.mxu0 0.0
  %1477 = vmatmul.mubr.f32.gmra.mxu0 %v1293
  %v1478 = vpop.f32.mrf.mxu0
  %v1479 = vadd.f32 %v68, %v1478
  %v1480 = vpop.f32.mrf.mxu0
  %1481 = vmatprep.mubr.f32.mxu0 0.0
  %1482 = vmatmul.mubr.f32.gmra.mxu0 %v1296
  %v1483 = vpop.f32.mrf.mxu0
  %v1484 = vadd.f32 %v68, %v1483
  %v1485 = vpop.f32.mrf.mxu0
  %1486 = vmatprep.mubr.f32.mxu0 0.0
  %1487 = vmatmul.mubr.f32.gmra.mxu0 %v1299
  %v1488 = vpop.f32.mrf.mxu0
  %v1489 = vadd.f32 %v68, %v1488
  %v1490 = vpop.f32.mrf.mxu0
  %1491 = vmatprep.mubr.f32.mxu0 0.0
  %1492 = vmatmul.mubr.f32.gmra.mxu0 %v1302
  %v1493 = vpop.f32.mrf.mxu0
  %v1494 = vadd.f32 %v68, %v1493
  %v1495 = vpop.f32.mrf.mxu0
  %1496 = vmatprep.mubr.f32.mxu0 0.0
  %1497 = vmatmul.mubr.f32.gmra.mxu0 %v1305
  %v1498 = vpop.f32.mrf.mxu0
  %v1499 = vadd.f32 %v68, %v1498
  %v1500 = vpop.f32.mrf.mxu0
  %1501 = vmatprep.mubr.f32.mxu0 0.0
  %1502 = vmatmul.mubr.f32.gmra.mxu0 %v1308
  %v1503 = vpop.f32.mrf.mxu0
  %v1504 = vadd.f32 %v68, %v1503
  %v1505 = vpop.f32.mrf.mxu0
  %1506 = vmatprep.mubr.f32.mxu0 0.0
  %1507 = vmatmul.mubr.f32.gmra.mxu0 %v1311
  %v1508 = vpop.f32.mrf.mxu0
  %v1509 = vadd.f32 %v68, %v1508
  %v1510 = vpop.f32.mrf.mxu0
  %1511 = vmatprep.mubr.f32.mxu0 0.0
  %1512 = vmatmul.mubr.f32.gmra.mxu0 %v1314
  %v1513 = vpop.f32.mrf.mxu0
  %v1514 = vadd.f32 %v68, %v1513
  %v1515 = vpop.f32.mrf.mxu0
  %1516 = vmatprep.mubr.f32.mxu0 0.0
  %1517 = vmatmul.mubr.f32.gmra.mxu0 %v1317
  %v1518 = vpop.f32.mrf.mxu0
  %v1519 = vadd.f32 %v68, %v1518
  %v1520 = vpop.f32.mrf.mxu0
  %1521 = vmatprep.mubr.f32.mxu0 0.0
  %1522 = vmatmul.mubr.f32.gmra.mxu0 %v1320
  %v1523 = vpop.f32.mrf.mxu0
  %v1524 = vadd.f32 %v68, %v1523
  %v1525 = vpop.f32.mrf.mxu0
  %1526 = vmatprep.mubr.f32.mxu0 0.0
  %1527 = vmatmul.mubr.f32.gmra.mxu0 %v1323
  %v1528 = vpop.f32.mrf.mxu0
  %v1529 = vadd.f32 %v68, %v1528
  %v1530 = vpop.f32.mrf.mxu0
  %1531 = vmatprep.mubr.f32.mxu0 0.0
  %1532 = vmatmul.mubr.f32.gmra.mxu0 %v1326
  %v1533 = vpop.f32.mrf.mxu0
  %v1534 = vadd.f32 %v68, %v1533
  %v1535 = vpop.f32.mrf.mxu0
  %1536 = vmatprep.mubr.f32.mxu0 0.0
  %1537 = vmatmul.mubr.f32.gmra.mxu0 %v1329
  %v1538 = vpop.f32.mrf.mxu0
  %v1539 = vadd.f32 %v68, %v1538
  %v1540 = vpop.f32.mrf.mxu0
  %1541 = vmatprep.mubr.f32.mxu0 0.0
  %1542 = vmatmul.mubr.f32.gmra.mxu0 %v1332
  %v1543 = vpop.f32.mrf.mxu0
  %v1544 = vadd.f32 %v68, %v1543
  %v1545 = vpop.f32.mrf.mxu0
  %1546 = vmatprep.mubr.f32.mxu0 0.0
  %1547 = vmatmul.mubr.f32.gmra.mxu0 %v1335
  %v1548 = vpop.f32.mrf.mxu0
  %v1549 = vadd.f32 %v68, %v1548
  %v1550 = vpop.f32.mrf.mxu0
  %1551 = vmatprep.mubr.f32.mxu0 0.0
  %1552 = vmatmul.mubr.f32.gmra.mxu0 %v1338
  %v1553 = vpop.f32.mrf.mxu0
  %v1554 = vadd.f32 %v68, %v1553
  %v1555 = vpop.f32.mrf.mxu0
  %1556 = vmatprep.mubr.f32.mxu0 0.0
  %1557 = vmatmul.mubr.f32.gmra.mxu0 %v1341
  %v1558 = vpop.f32.mrf.mxu0
  %v1559 = vadd.f32 %v68, %v1558
  %v1560 = vpop.f32.mrf.mxu0
  %1561 = vmatprep.mubr.f32.mxu0 0.0
  %1562 = vmatmul.mubr.f32.gmra.mxu0 %v1344
  %v1563 = vpop.f32.mrf.mxu0
  %v1564 = vadd.f32 %v68, %v1563
  %v1565 = vpop.f32.mrf.mxu0
  %1566 = vmatprep.mubr.f32.mxu0 0.0
  %1567 = vmatmul.mubr.f32.gmra.mxu0 %v1347
  %v1568 = vpop.f32.mrf.mxu0
  %v1569 = vadd.f32 %v68, %v1568
  %v1570 = vpop.f32.mrf.mxu0
  %1571 = vmatprep.mubr.f32.mxu0 0.0
  %1572 = vmatmul.mubr.f32.gmra.mxu0 %v1350
  %v1573 = vpop.f32.mrf.mxu0
  %v1574 = vadd.f32 %v68, %v1573
  %v1575 = vpop.f32.mrf.mxu0
  %1576 = vmatprep.mubr.f32.mxu0 0.0
  %1577 = vmatmul.mubr.f32.gmra.mxu0 %v1353
  %v1578 = vpop.f32.mrf.mxu0
  %v1579 = vadd.f32 %v68, %v1578
  %v1580 = vpop.f32.mrf.mxu0
  %1581 = vmatprep.mubr.f32.mxu0 0.0
  %1582 = vmatmul.mubr.f32.gmra.mxu0 %v1356
  %v1583 = vpop.f32.mrf.mxu0
  %v1584 = vadd.f32 %v68, %v1583
  %v1585 = vpop.f32.mrf.mxu0
  %1586 = vmatprep.mubr.f32.mxu0 0.0
  %1587 = vmatmul.mubr.f32.gmra.mxu0 %v1359
  %v1588 = vpop.f32.mrf.mxu0
  %v1589 = vadd.f32 %v68, %v1588
  %v1590 = vpop.f32.mrf.mxu0
  %1591 = vmatprep.mubr.f32.mxu0 0.0
  %1592 = vmatmul.mubr.f32.gmra.mxu0 %v1362
  %v1593 = vpop.f32.mrf.mxu0
  %v1594 = vadd.f32 %v68, %v1593
  %v1595 = vpop.f32.mrf.mxu0
  %1596 = vmatprep.mubr.f32.mxu0 0.0
  %1597 = vmatmul.mubr.f32.gmra.mxu0 %v1365
  %v1598 = vpop.f32.mrf.mxu0
  %v1599 = vadd.f32 %v68, %v1598
  %v1600 = vpop.f32.mrf.mxu0
  %1601 = vmatprep.mubr.f32.mxu0 0.0
  %1602 = vmatmul.mubr.f32.gmra.mxu0 %v1368
  %v1603 = vpop.f32.mrf.mxu0
  %v1604 = vadd.f32 %v68, %v1603
  %v1605 = vpop.f32.mrf.mxu0
  %1606 = vmatprep.mubr.f32.mxu0 0.0
  %1607 = vmatmul.mubr.f32.gmra.mxu0 %v1371
  %v1608 = vpop.f32.mrf.mxu0
  %v1609 = vadd.f32 %v68, %v1608
  %v1610 = vpop.f32.mrf.mxu0
  %1611 = vmatprep.mubr.f32.mxu0 0.0
  %1612 = vmatmul.mubr.f32.gmra.mxu0 %v1374
  %v1613 = vpop.f32.mrf.mxu0
  %v1614 = vadd.f32 %v68, %v1613
  %v1615 = vpop.f32.mrf.mxu0
  %1616 = vmatprep.mubr.f32.mxu0 0.0
  %1617 = vmatmul.mubr.f32.gmra.mxu0 %v1377
  %v1618 = vpop.f32.mrf.mxu0
  %v1619 = vadd.f32 %v68, %v1618
  %v1620 = vpop.f32.mrf.mxu0
  %1621 = vmatprep.mubr.f32.mxu0 0.0
  %1622 = vmatmul.mubr.f32.gmra.mxu0 %v1380
  %v1623 = vpop.f32.mrf.mxu0
  %v1624 = vadd.f32 %v68, %v1623
  %v1625 = vpop.f32.mrf.mxu0
  %1626 = vdwg.mxu0
  %v1627 = vmax.f32 %v1060, %v1449
  %v1628 = vmax.f32 %v1065, %v1454
  %v1629 = vmax.f32 %v1070, %v1459
  %v1630 = vmax.f32 %v1075, %v1464
  %v1631 = vmax.f32 %v1080, %v1469
  %v1632 = vmax.f32 %v1085, %v1474
  %v1633 = vmax.f32 %v1090, %v1479
  %v1634 = vmax.f32 %v1095, %v1484
  %v1635 = vmax.f32 %v1100, %v1489
  %v1636 = vmax.f32 %v1105, %v1494
  %v1637 = vmax.f32 %v1110, %v1499
  %v1638 = vmax.f32 %v1115, %v1504
  %v1639 = vmax.f32 %v1120, %v1509
  %v1640 = vmax.f32 %v1125, %v1514
  %v1641 = vmax.f32 %v1130, %v1519
  %v1642 = vmax.f32 %v1135, %v1524
  %v1643 = vmax.f32 %v1140, %v1529
  %v1644 = vmax.f32 %v1145, %v1534
  %v1645 = vmax.f32 %v1150, %v1539
  %v1646 = vmax.f32 %v1155, %v1544
  %v1647 = vmax.f32 %v1160, %v1549
  %v1648 = vmax.f32 %v1165, %v1554
  %v1649 = vmax.f32 %v1170, %v1559
  %v1650 = vmax.f32 %v1175, %v1564
  %v1651 = vmax.f32 %v1180, %v1569
  %v1652 = vmax.f32 %v1185, %v1574
  %v1653 = vmax.f32 %v1190, %v1579
  %v1654 = vmax.f32 %v1195, %v1584
  %v1655 = vmax.f32 %v1200, %v1589
  %v1656 = vmax.f32 %v1205, %v1594
  %v1657 = vmax.f32 %v1210, %v1599
  %v1658 = vmax.f32 %v1215, %v1604
  %v1659 = vmax.f32 %v1220, %v1609
  %v1660 = vmax.f32 %v1225, %v1614
  %v1661 = vmax.f32 %v1230, %v1619
  %v1662 = vmax.f32 %v1235, %v1624
  %v1663 = vmax.f32 %v813, %v1627
  %v1664 = vmax.f32 %v814, %v1628
  %v1665 = vmax.f32 %v815, %v1629
  %v1666 = vmax.f32 %v816, %v1630
  %v1667 = vmax.f32 %v817, %v1631
  %v1668 = vmax.f32 %v818, %v1632
  %v1669 = vmax.f32 %v819, %v1633
  %v1670 = vmax.f32 %v820, %v1634
  %v1671 = vmax.f32 %v821, %v1635
  %v1672 = vmax.f32 %v822, %v1636
  %v1673 = vmax.f32 %v823, %v1637
  %v1674 = vmax.f32 %v824, %v1638
  %v1675 = vmax.f32 %v825, %v1639
  %v1676 = vmax.f32 %v826, %v1640
  %v1677 = vmax.f32 %v827, %v1641
  %v1678 = vmax.f32 %v828, %v1642
  %v1679 = vmax.f32 %v829, %v1643
  %v1680 = vmax.f32 %v830, %v1644
  %v1681 = vmax.f32 %v831, %v1645
  %v1682 = vmax.f32 %v832, %v1646
  %v1683 = vmax.f32 %v833, %v1647
  %v1684 = vmax.f32 %v834, %v1648
  %v1685 = vmax.f32 %v835, %v1649
  %v1686 = vmax.f32 %v836, %v1650
  %v1687 = vmax.f32 %v837, %v1651
  %v1688 = vmax.f32 %v838, %v1652
  %v1689 = vmax.f32 %v839, %v1653
  %v1690 = vmax.f32 %v840, %v1654
  %v1691 = vmax.f32 %v841, %v1655
  %v1692 = vmax.f32 %v842, %v1656
  %v1693 = vmax.f32 %v843, %v1657
  %v1694 = vmax.f32 %v844, %v1658
  %v1695 = vmax.f32 %v845, %v1659
  %v1696 = vmax.f32 %v846, %v1660
  %v1697 = vmax.f32 %v847, %v1661
  %v1698 = vmax.f32 %v848, %v1662
  %vm1699 = vcmask 48128
  %1700 = vst.msk [vmem:[%s6] sm:$0xff] %vm1699, %v1663
  %1701 = vst.msk [vmem:[%s6 + $0x8] sm:$0xff] %vm1699, %v1664
  %1702 = vst.msk [vmem:[%s6 + $0x10] sm:$0xff] %vm1699, %v1665
  %1703 = vst.msk [vmem:[%s6 + $0x18] sm:$0xff] %vm1699, %v1666
  %1704 = vst.msk [vmem:[%s6 + $0x20] sm:$0xff] %vm1699, %v1667
  %1705 = vst.msk [vmem:[%s6 + $0x28] sm:$0xff] %vm1699, %v1668
  %1706 = vst.msk [vmem:[%s6 + $0x30] sm:$0xff] %vm1699, %v1669
  %1707 = vst.msk [vmem:[%s6 + $0x38] sm:$0xff] %vm1699, %v1670
  %1708 = vst.msk [vmem:[%s6 + $0x40] sm:$0xff] %vm1699, %v1671
  %1709 = vst.msk [vmem:[%s6 + $0x48] sm:$0xff] %vm1699, %v1672
  %1710 = vst.msk [vmem:[%s6 + $0x50] sm:$0xff] %vm1699, %v1673
  %1711 = vst.msk [vmem:[%s6 + $0x58] sm:$0xff] %vm1699, %v1674
  %1712 = vst.msk [vmem:[%s6 + $0x60] sm:$0xff] %vm1699, %v1675
  %1713 = vst.msk [vmem:[%s6 + $0x68] sm:$0xff] %vm1699, %v1676
  %1714 = vst.msk [vmem:[%s6 + $0x70] sm:$0xff] %vm1699, %v1677
  %1715 = vst.msk [vmem:[%s6 + $0x78] sm:$0xff] %vm1699, %v1678
  %1716 = vst.msk [vmem:[%s6 + $0x80] sm:$0xff] %vm1699, %v1679
  %1717 = vst.msk [vmem:[%s6 + $0x88] sm:$0xff] %vm1699, %v1680
  %1718 = vst.msk [vmem:[%s6 + $0x90] sm:$0xff] %vm1699, %v1681
  %1719 = vst.msk [vmem:[%s6 + $0x98] sm:$0xff] %vm1699, %v1682
  %1720 = vst.msk [vmem:[%s6 + $0xa0] sm:$0xff] %vm1699, %v1683
  %1721 = vst.msk [vmem:[%s6 + $0xa8] sm:$0xff] %vm1699, %v1684
  %1722 = vst.msk [vmem:[%s6 + $0xb0] sm:$0xff] %vm1699, %v1685
  %1723 = vst.msk [vmem:[%s6 + $0xb8] sm:$0xff] %vm1699, %v1686
  %1724 = vst.msk [vmem:[%s6 + $0xc0] sm:$0xff] %vm1699, %v1687
  %1725 = vst.msk [vmem:[%s6 + $0xc8] sm:$0xff] %vm1699, %v1688
  %1726 = vst.msk [vmem:[%s6 + $0xd0] sm:$0xff] %vm1699, %v1689
  %1727 = vst.msk [vmem:[%s6 + $0xd8] sm:$0xff] %vm1699, %v1690
  %1728 = vst.msk [vmem:[%s6 + $0xe0] sm:$0xff] %vm1699, %v1691
  %1729 = vst.msk [vmem:[%s6 + $0xe8] sm:$0xff] %vm1699, %v1692
  %1730 = vst.msk [vmem:[%s6 + $0xf0] sm:$0xff] %vm1699, %v1693
  %1731 = vst.msk [vmem:[%s6 + $0xf8] sm:$0xff] %vm1699, %v1694
  %1732 = vst.msk [vmem:[%s6 + $0x100] sm:$0xff] %vm1699, %v1695
  %1733 = vst.msk [vmem:[%s6 + $0x108] sm:$0xff] %vm1699, %v1696
  %1734 = vst.msk [vmem:[%s6 + $0x110] sm:$0xff] %vm1699, %v1697
  %1735 = vst.msk [vmem:[%s6 + $0x118] sm:$0xff] %vm1699, %v1698
  // Predicated region
  $region26: #{_lambda_.3} parent=0 // pred_check
    _
  $region27: #{_lambda_.3} parent=0 // pred_check_branch
    %1737 = sbr.rel (0) target = $region29
  $region28: #{_lambda_.3} parent=0 // pred_region
    _
  $region29: #{_lambda_.3} parent=0 // pred_fallthru
    _
  // Predicated region
  $region30: #{_lambda_.3} parent=0 // pred_check
    _
  $region31: #{_lambda_.3} parent=0 // pred_check_branch
    %1739 = sbr.rel (0) target = $region33
  $region32: #{_lambda_.3} parent=0 // pred_region
    _
  $region33: #{_lambda_.3} parent=0 // pred_fallthru
    _

// kernel: _lambda_.4
$region0: #{_lambda_.4}
  #allocation0 [shape = 'u32[]', space=smem, size = 0x4, offset = 0x4, fixed_abs, tag = 'smem constant byte address 0x4 - core index']
  #allocation1 [shape = 'u32[144,128]{1,0:T(1,128)}', space=vmem, size = 0x12000, scoped, tag = 'internal scratch']
  %s0 = inlined_call_operand.vmem [shape: f32[32,160], index: 0, kind: input, shape index: {}]
  %s1 = inlined_call_operand.vmem [shape: f32[32,160], index: 1, kind: input, shape index: {}]
  %s2 = inlined_call_operand.vmem [shape: f32[32,160], index: 2, kind: input, shape index: {}]
  %s3 = inlined_call_operand.vmem [shape: f32[32,160], index: 3, kind: input, shape index: {}]
  %s4 = inlined_call_operand.vmem [shape: f32[160,16], index: 4, kind: input, shape index: {}]
  %s5 = inlined_call_operand.vmem [shape: f32[1,16], index: 5, kind: input, shape index: {}]
  %s6 = inlined_call_operand.vmem [shape: f32[32,16], index: 6, kind: output, shape index: {}]
  %s7 = sld [smem:[#allocation0]]
  $region34: #{_lambda_.4} parent=0
    _
  %s9 = ssub.s32 1, %s7
  %s10 = scalar_select 0, %s9, %s7
  // Predicated region
  $region2: #{_lambda_.4} parent=0 // pred_check
    _
  $region3: #{_lambda_.4} parent=0 // pred_check_branch
    %12 = sbr.rel (0) target = $region5
  $region4: #{_lambda_.4} parent=0 // pred_region
    _
  $region5: #{_lambda_.4} parent=0 // pred_fallthru
    _
  // Predicated region
  $region6: #{_lambda_.4} parent=0 // pred_check
    _
  $region7: #{_lambda_.4} parent=0 // pred_check_branch
    %14 = sbr.rel (0) target = $region9
  $region8: #{_lambda_.4} parent=0 // pred_region
    _
  $region9: #{_lambda_.4} parent=0 // pred_fallthru
    _
  // Predicated region
  $region10: #{_lambda_.4} parent=0 // pred_check
    _
  $region11: #{_lambda_.4} parent=0 // pred_check_branch
    %16 = sbr.rel (0) target = $region13
  $region12: #{_lambda_.4} parent=0 // pred_region
    _
  $region13: #{_lambda_.4} parent=0 // pred_fallthru
    _
  // Predicated region
  $region14: #{_lambda_.4} parent=0 // pred_check
    _
  $region15: #{_lambda_.4} parent=0 // pred_check_branch
    %18 = sbr.rel (0) target = $region17
  $region16: #{_lambda_.4} parent=0 // pred_region
    _
  $region17: #{_lambda_.4} parent=0 // pred_fallthru
    _
  // Predicated region
  $region18: #{_lambda_.4} parent=0 // pred_check
    _
  $region19: #{_lambda_.4} parent=0 // pred_check_branch
    %20 = sbr.rel (0) target = $region21
  $region20: #{_lambda_.4} parent=0 // pred_region
    _
  $region21: #{_lambda_.4} parent=0 // pred_fallthru
    _
  // Predicated region
  $region22: #{_lambda_.4} parent=0 // pred_check
    _
  $region23: #{_lambda_.4} parent=0 // pred_check_branch
    %22 = sbr.rel (0) target = $region25
  $region24: #{_lambda_.4} parent=0 // pred_region
    _
  $region25: #{_lambda_.4} parent=0 // pred_fallthru
    _
  %v23 = vld [vmem:[%s4] sm:$0xff]
  %v24 = vld [vmem:[%s4 + $0x8] sm:$0xff]
  %v25 = vld [vmem:[%s4 + $0x10] sm:$0xff]
  %v26 = vld [vmem:[%s4 + $0x18] sm:$0xff]
  %v27 = vld [vmem:[%s4 + $0x20] sm:$0xff]
  %v28 = vld [vmem:[%s4 + $0x28] sm:$0xff]
  %v29 = vld [vmem:[%s4 + $0x30] sm:$0xff]
  %v30 = vld [vmem:[%s4 + $0x38] sm:$0xff]
  %v31 = vld [vmem:[%s4 + $0x40] sm:$0xff]
  %v32 = vld [vmem:[%s4 + $0x48] sm:$0xff]
  %v33 = vld [vmem:[%s4 + $0x50] sm:$0xff]
  %v34 = vld [vmem:[%s4 + $0x58] sm:$0xff]
  %v35 = vld [vmem:[%s4 + $0x60] sm:$0xff]
  %v36 = vld [vmem:[%s4 + $0x68] sm:$0xff]
  %v37 = vld [vmem:[%s4 + $0x70] sm:$0xff]
  %v38 = vld [vmem:[%s4 + $0x78] sm:$0xff]
  %v39 = vld [vmem:[%s4 + $0x80] sm:$0xff]
  %v40 = vld [vmem:[%s4 + $0x88] sm:$0xff]
  %v41 = vld [vmem:[%s4 + $0x90] sm:$0xff]
  %v42 = vld [vmem:[%s4 + $0x98] sm:$0xff]
  %v43 = vld [vmem:[%s5] sm:$0x1]
  %v44 = vld [vmem:[%s0] sm:$0xff]
  %v45 = vld [vmem:[%s0 + $0x8] sm:$0xff]
  %v46 = vld [vmem:[%s0 + $0x10] sm:$0xff]
  %v47 = vld [vmem:[%s0 + $0x18] sm:$0xff]
  %v48 = vld [vmem:[%s0 + $0x20] sm:$0xff]
  %v49 = vld [vmem:[%s0 + $0x28] sm:$0xff]
  %v50 = vld [vmem:[%s0 + $0x30] sm:$0xff]
  %v51 = vld [vmem:[%s0 + $0x38] sm:$0xff]
  %v53 = vlaneseq
  %v54 = vshrl.u32 %v53, 7
  %v55 = vsub.s32 0, %v54
  %v56 = vrot.slane %v43, %v55
  %vm58 = vcmask 261120
  %v60 = vsel %vm58, %v45, 0
  %v63 = vsel %vm58, %v47, 0
  %v66 = vsel %vm58, %v49, 0
  %v69 = vsel %vm58, %v51, 0
  %71 = vmatprep.subr.mxu0 0.0
  %72 = vmatpush1.msra.mxu0 %v38
  %73 = vmatprep.subr.mxu0 0.0
  %74 = vmatpush1.msra.mxu0 %v37
  %75 = vmatprep.subr.mxu0 0.0
  %76 = vmatpush1.msra.mxu0 %v36
  %77 = vmatprep.subr.mxu0 0.0
  %78 = vmatpush1.msra.mxu0 %v35
  %79 = vmatprep.subr.mxu0 0.0
  %80 = vmatpush1.msra.mxu0 %v34
  %81 = vmatprep.subr.mxu0 0.0
  %82 = vmatpush1.msra.mxu0 %v33
  %83 = vmatprep.subr.mxu0 0.0
  %84 = vmatpush1.msra.mxu0 %v32
  %85 = vmatprep.subr.mxu0 0.0
  %86 = vmatpush1.msra.mxu0 %v31
  %87 = vmatprep.subr.mxu0 0.0
  %88 = vmatpush1.msra.mxu0 %v30
  %89 = vmatprep.subr.mxu0 0.0
  %90 = vmatpush1.msra.mxu0 %v29
  %91 = vmatprep.subr.mxu0 0.0
  %92 = vmatpush1.msra.mxu0 %v28
  %93 = vmatprep.subr.mxu0 0.0
  %94 = vmatpush1.msra.mxu0 %v27
  %95 = vmatprep.subr.mxu0 0.0
  %96 = vmatpush1.msra.mxu0 %v26
  %97 = vmatprep.subr.mxu0 0.0
  %98 = vmatpush1.msra.mxu0 %v25
  %99 = vmatprep.subr.mxu0 0.0
  %100 = vmatpush1.msra.mxu0 %v24
  %101 = vmatprep.subr.mxu0 0.0
  %102 = vmatpush1.msra.mxu0 %v23
  %103 = vmatprep.subr.mxu0 0.0
  %104 = vmatpush2.msra.mxu0 0.0
  %105 = vmatprep.subr.mxu0 0.0
  %106 = vmatpush2.msra.mxu0 0.0
  %107 = vmatprep.subr.mxu0 0.0
  %108 = vmatpush2.msra.mxu0 0.0
  %109 = vmatprep.subr.mxu0 0.0
  %110 = vmatpush2.msra.mxu0 0.0
  %111 = vmatprep.subr.mxu0 0.0
  %112 = vmatpush2.msra.mxu0 0.0
  %113 = vmatprep.subr.mxu0 0.0
  %114 = vmatpush2.msra.mxu0 0.0
  %115 = vmatprep.subr.mxu0 0.0
  %116 = vmatpush2.msra.mxu0 0.0
  %117 = vmatprep.subr.mxu0 0.0
  %118 = vmatpush2.msra.mxu0 0.0
  %119 = vmatprep.subr.mxu0 0.0
  %120 = vmatpush2.msra.mxu0 0.0
  %121 = vmatprep.subr.mxu0 0.0
  %122 = vmatpush2.msra.mxu0 0.0
  %123 = vmatprep.subr.mxu0 0.0
  %124 = vmatpush2.msra.mxu0 0.0
  %125 = vmatprep.subr.mxu0 0.0
  %126 = vmatpush2.msra.mxu0 0.0
  %127 = vmatprep.subr.mxu0 0.0
  %128 = vmatpush2.msra.mxu0 %v42
  %129 = vmatprep.subr.mxu0 0.0
  %130 = vmatpush2.msra.mxu0 %v41
  %131 = vmatprep.subr.mxu0 0.0
  %132 = vmatpush2.msra.mxu0 %v40
  %133 = vmatprep.subr.mxu0 0.0
  %134 = vmatpush2.msra.mxu0 %v39
  %135 = vmatprep.mubr.f32.mxu0 %v60
  %136 = vmatmul.mubr.f32.gmra.mxu0 %v44
  %v137 = vpop.f32.mrf.mxu0
  %v138 = vadd.f32 %v56, %v137
  %v139 = vpop.f32.mrf.mxu0
  %140 = vmatprep.mubr.f32.mxu0 %v63
  %141 = vmatmul.mubr.f32.gmra.mxu0 %v46
  %v142 = vpop.f32.mrf.mxu0
  %v143 = vadd.f32 %v56, %v142
  %v144 = vpop.f32.mrf.mxu0
  %145 = vmatprep.mubr.f32.mxu0 %v66
  %146 = vmatmul.mubr.f32.gmra.mxu0 %v48
  %v147 = vpop.f32.mrf.mxu0
  %v148 = vadd.f32 %v56, %v147
  %v149 = vpop.f32.mrf.mxu0
  %150 = vmatprep.mubr.f32.mxu0 %v69
  %151 = vmatmul.mubr.f32.gmra.mxu0 %v50
  %v152 = vpop.f32.mrf.mxu0
  %v153 = vadd.f32 %v56, %v152
  %v154 = vpop.f32.mrf.mxu0
  %155 = vdwg.mxu0
  %v156 = vld [vmem:[%s1] sm:$0xff]
  %v157 = vld [vmem:[%s1 + $0x8] sm:$0xff]
  %v158 = vld [vmem:[%s1 + $0x10] sm:$0xff]
  %v159 = vld [vmem:[%s1 + $0x18] sm:$0xff]
  %v160 = vld [vmem:[%s1 + $0x20] sm:$0xff]
  %v161 = vld [vmem:[%s1 + $0x28] sm:$0xff]
  %v162 = vld [vmem:[%s1 + $0x30] sm:$0xff]
  %v163 = vld [vmem:[%s1 + $0x38] sm:$0xff]
  %v165 = vsel %vm58, %v157, 0
  %v168 = vsel %vm58, %v159, 0
  %v171 = vsel %vm58, %v161, 0
  %v174 = vsel %vm58, %v163, 0
  %176 = vmatprep.subr.mxu0 0.0
  %177 = vmatpush1.msra.mxu0 %v38
  %178 = vmatprep.subr.mxu0 0.0
  %179 = vmatpush1.msra.mxu0 %v37
  %180 = vmatprep.subr.mxu0 0.0
  %181 = vmatpush1.msra.mxu0 %v36
  %182 = vmatprep.subr.mxu0 0.0
  %183 = vmatpush1.msra.mxu0 %v35
  %184 = vmatprep.subr.mxu0 0.0
  %185 = vmatpush1.msra.mxu0 %v34
  %186 = vmatprep.subr.mxu0 0.0
  %187 = vmatpush1.msra.mxu0 %v33
  %188 = vmatprep.subr.mxu0 0.0
  %189 = vmatpush1.msra.mxu0 %v32
  %190 = vmatprep.subr.mxu0 0.0
  %191 = vmatpush1.msra.mxu0 %v31
  %192 = vmatprep.subr.mxu0 0.0
  %193 = vmatpush1.msra.mxu0 %v30
  %194 = vmatprep.subr.mxu0 0.0
  %195 = vmatpush1.msra.mxu0 %v29
  %196 = vmatprep.subr.mxu0 0.0
  %197 = vmatpush1.msra.mxu0 %v28
  %198 = vmatprep.subr.mxu0 0.0
  %199 = vmatpush1.msra.mxu0 %v27
  %200 = vmatprep.subr.mxu0 0.0
  %201 = vmatpush1.msra.mxu0 %v26
  %202 = vmatprep.subr.mxu0 0.0
  %203 = vmatpush1.msra.mxu0 %v25
  %204 = vmatprep.subr.mxu0 0.0
  %205 = vmatpush1.msra.mxu0 %v24
  %206 = vmatprep.subr.mxu0 0.0
  %207 = vmatpush1.msra.mxu0 %v23
  %208 = vmatprep.subr.mxu0 0.0
  %209 = vmatpush2.msra.mxu0 0.0
  %210 = vmatprep.subr.mxu0 0.0
  %211 = vmatpush2.msra.mxu0 0.0
  %212 = vmatprep.subr.mxu0 0.0
  %213 = vmatpush2.msra.mxu0 0.0
  %214 = vmatprep.subr.mxu0 0.0
  %215 = vmatpush2.msra.mxu0 0.0
  %216 = vmatprep.subr.mxu0 0.0
  %217 = vmatpush2.msra.mxu0 0.0
  %218 = vmatprep.subr.mxu0 0.0
  %219 = vmatpush2.msra.mxu0 0.0
  %220 = vmatprep.subr.mxu0 0.0
  %221 = vmatpush2.msra.mxu0 0.0
  %222 = vmatprep.subr.mxu0 0.0
  %223 = vmatpush2.msra.mxu0 0.0
  %224 = vmatprep.subr.mxu0 0.0
  %225 = vmatpush2.msra.mxu0 0.0
  %226 = vmatprep.subr.mxu0 0.0
  %227 = vmatpush2.msra.mxu0 0.0
  %228 = vmatprep.subr.mxu0 0.0
  %229 = vmatpush2.msra.mxu0 0.0
  %230 = vmatprep.subr.mxu0 0.0
  %231 = vmatpush2.msra.mxu0 0.0
  %232 = vmatprep.subr.mxu0 0.0
  %233 = vmatpush2.msra.mxu0 %v42
  %234 = vmatprep.subr.mxu0 0.0
  %235 = vmatpush2.msra.mxu0 %v41
  %236 = vmatprep.subr.mxu0 0.0
  %237 = vmatpush2.msra.mxu0 %v40
  %238 = vmatprep.subr.mxu0 0.0
  %239 = vmatpush2.msra.mxu0 %v39
  %240 = vmatprep.mubr.f32.mxu0 %v165
  %241 = vmatmul.mubr.f32.gmra.mxu0 %v156
  %v242 = vpop.f32.mrf.mxu0
  %v243 = vadd.f32 %v56, %v242
  %v244 = vpop.f32.mrf.mxu0
  %245 = vmatprep.mubr.f32.mxu0 %v168
  %246 = vmatmul.mubr.f32.gmra.mxu0 %v158
  %v247 = vpop.f32.mrf.mxu0
  %v248 = vadd.f32 %v56, %v247
  %v249 = vpop.f32.mrf.mxu0
  %250 = vmatprep.mubr.f32.mxu0 %v171
  %251 = vmatmul.mubr.f32.gmra.mxu0 %v160
  %v252 = vpop.f32.mrf.mxu0
  %v253 = vadd.f32 %v56, %v252
  %v254 = vpop.f32.mrf.mxu0
  %255 = vmatprep.mubr.f32.mxu0 %v174
  %256 = vmatmul.mubr.f32.gmra.mxu0 %v162
  %v257 = vpop.f32.mrf.mxu0
  %v258 = vadd.f32 %v56, %v257
  %v259 = vpop.f32.mrf.mxu0
  %260 = vdwg.mxu0
  %v261 = vmax.f32 %v138, %v243
  %v262 = vmax.f32 %v143, %v248
  %v263 = vmax.f32 %v148, %v253
  %v264 = vmax.f32 %v153, %v258
  %v265 = vld [vmem:[%s2] sm:$0xff]
  %v266 = vld [vmem:[%s2 + $0x8] sm:$0xff]
  %v267 = vld [vmem:[%s2 + $0x10] sm:$0xff]
  %v268 = vld [vmem:[%s2 + $0x18] sm:$0xff]
  %v269 = vld [vmem:[%s2 + $0x20] sm:$0xff]
  %v270 = vld [vmem:[%s2 + $0x28] sm:$0xff]
  %v271 = vld [vmem:[%s2 + $0x30] sm:$0xff]
  %v272 = vld [vmem:[%s2 + $0x38] sm:$0xff]
  %v274 = vsel %vm58, %v266, 0
  %v277 = vsel %vm58, %v268, 0
  %v280 = vsel %vm58, %v270, 0
  %v283 = vsel %vm58, %v272, 0
  %285 = vmatprep.subr.mxu0 0.0
  %286 = vmatpush1.msra.mxu0 %v38
  %287 = vmatprep.subr.mxu0 0.0
  %288 = vmatpush1.msra.mxu0 %v37
  %289 = vmatprep.subr.mxu0 0.0
  %290 = vmatpush1.msra.mxu0 %v36
  %291 = vmatprep.subr.mxu0 0.0
  %292 = vmatpush1.msra.mxu0 %v35
  %293 = vmatprep.subr.mxu0 0.0
  %294 = vmatpush1.msra.mxu0 %v34
  %295 = vmatprep.subr.mxu0 0.0
  %296 = vmatpush1.msra.mxu0 %v33
  %297 = vmatprep.subr.mxu0 0.0
  %298 = vmatpush1.msra.mxu0 %v32
  %299 = vmatprep.subr.mxu0 0.0
  %300 = vmatpush1.msra.mxu0 %v31
  %301 = vmatprep.subr.mxu0 0.0
  %302 = vmatpush1.msra.mxu0 %v30
  %303 = vmatprep.subr.mxu0 0.0
  %304 = vmatpush1.msra.mxu0 %v29
  %305 = vmatprep.subr.mxu0 0.0
  %306 = vmatpush1.msra.mxu0 %v28
  %307 = vmatprep.subr.mxu0 0.0
  %308 = vmatpush1.msra.mxu0 %v27
  %309 = vmatprep.subr.mxu0 0.0
  %310 = vmatpush1.msra.mxu0 %v26
  %311 = vmatprep.subr.mxu0 0.0
  %312 = vmatpush1.msra.mxu0 %v25
  %313 = vmatprep.subr.mxu0 0.0
  %314 = vmatpush1.msra.mxu0 %v24
  %315 = vmatprep.subr.mxu0 0.0
  %316 = vmatpush1.msra.mxu0 %v23
  %317 = vmatprep.subr.mxu0 0.0
  %318 = vmatpush2.msra.mxu0 0.0
  %319 = vmatprep.subr.mxu0 0.0
  %320 = vmatpush2.msra.mxu0 0.0
  %321 = vmatprep.subr.mxu0 0.0
  %322 = vmatpush2.msra.mxu0 0.0
  %323 = vmatprep.subr.mxu0 0.0
  %324 = vmatpush2.msra.mxu0 0.0
  %325 = vmatprep.subr.mxu0 0.0
  %326 = vmatpush2.msra.mxu0 0.0
  %327 = vmatprep.subr.mxu0 0.0
  %328 = vmatpush2.msra.mxu0 0.0
  %329 = vmatprep.subr.mxu0 0.0
  %330 = vmatpush2.msra.mxu0 0.0
  %331 = vmatprep.subr.mxu0 0.0
  %332 = vmatpush2.msra.mxu0 0.0
  %333 = vmatprep.subr.mxu0 0.0
  %334 = vmatpush2.msra.mxu0 0.0
  %335 = vmatprep.subr.mxu0 0.0
  %336 = vmatpush2.msra.mxu0 0.0
  %337 = vmatprep.subr.mxu0 0.0
  %338 = vmatpush2.msra.mxu0 0.0
  %339 = vmatprep.subr.mxu0 0.0
  %340 = vmatpush2.msra.mxu0 0.0
  %341 = vmatprep.subr.mxu0 0.0
  %342 = vmatpush2.msra.mxu0 %v42
  %343 = vmatprep.subr.mxu0 0.0
  %344 = vmatpush2.msra.mxu0 %v41
  %345 = vmatprep.subr.mxu0 0.0
  %346 = vmatpush2.msra.mxu0 %v40
  %347 = vmatprep.subr.mxu0 0.0
  %348 = vmatpush2.msra.mxu0 %v39
  %349 = vmatprep.mubr.f32.mxu0 %v274
  %350 = vmatmul.mubr.f32.gmra.mxu0 %v265
  %v351 = vpop.f32.mrf.mxu0
  %v352 = vadd.f32 %v56, %v351
  %v353 = vpop.f32.mrf.mxu0
  %354 = vmatprep.mubr.f32.mxu0 %v277
  %355 = vmatmul.mubr.f32.gmra.mxu0 %v267
  %v356 = vpop.f32.mrf.mxu0
  %v357 = vadd.f32 %v56, %v356
  %v358 = vpop.f32.mrf.mxu0
  %359 = vmatprep.mubr.f32.mxu0 %v280
  %360 = vmatmul.mubr.f32.gmra.mxu0 %v269
  %v361 = vpop.f32.mrf.mxu0
  %v362 = vadd.f32 %v56, %v361
  %v363 = vpop.f32.mrf.mxu0
  %364 = vmatprep.mubr.f32.mxu0 %v283
  %365 = vmatmul.mubr.f32.gmra.mxu0 %v271
  %v366 = vpop.f32.mrf.mxu0
  %v367 = vadd.f32 %v56, %v366
  %v368 = vpop.f32.mrf.mxu0
  %369 = vdwg.mxu0
  %v370 = vld [vmem:[%s3] sm:$0xff]
  %v371 = vld [vmem:[%s3 + $0x8] sm:$0xff]
  %v372 = vld [vmem:[%s3 + $0x10] sm:$0xff]
  %v373 = vld [vmem:[%s3 + $0x18] sm:$0xff]
  %v374 = vld [vmem:[%s3 + $0x20] sm:$0xff]
  %v375 = vld [vmem:[%s3 + $0x28] sm:$0xff]
  %v376 = vld [vmem:[%s3 + $0x30] sm:$0xff]
  %v377 = vld [vmem:[%s3 + $0x38] sm:$0xff]
  %v379 = vsel %vm58, %v371, 0
  %v382 = vsel %vm58, %v373, 0
  %v385 = vsel %vm58, %v375, 0
  %v388 = vsel %vm58, %v377, 0
  %390 = vmatprep.subr.mxu0 0.0
  %391 = vmatpush1.msra.mxu0 %v38
  %392 = vmatprep.subr.mxu0 0.0
  %393 = vmatpush1.msra.mxu0 %v37
  %394 = vmatprep.subr.mxu0 0.0
  %395 = vmatpush1.msra.mxu0 %v36
  %396 = vmatprep.subr.mxu0 0.0
  %397 = vmatpush1.msra.mxu0 %v35
  %398 = vmatprep.subr.mxu0 0.0
  %399 = vmatpush1.msra.mxu0 %v34
  %400 = vmatprep.subr.mxu0 0.0
  %401 = vmatpush1.msra.mxu0 %v33
  %402 = vmatprep.subr.mxu0 0.0
  %403 = vmatpush1.msra.mxu0 %v32
  %404 = vmatprep.subr.mxu0 0.0
  %405 = vmatpush1.msra.mxu0 %v31
  %406 = vmatprep.subr.mxu0 0.0
  %407 = vmatpush1.msra.mxu0 %v30
  %408 = vmatprep.subr.mxu0 0.0
  %409 = vmatpush1.msra.mxu0 %v29
  %410 = vmatprep.subr.mxu0 0.0
  %411 = vmatpush1.msra.mxu0 %v28
  %412 = vmatprep.subr.mxu0 0.0
  %413 = vmatpush1.msra.mxu0 %v27
  %414 = vmatprep.subr.mxu0 0.0
  %415 = vmatpush1.msra.mxu0 %v26
  %416 = vmatprep.subr.mxu0 0.0
  %417 = vmatpush1.msra.mxu0 %v25
  %418 = vmatprep.subr.mxu0 0.0
  %419 = vmatpush1.msra.mxu0 %v24
  %420 = vmatprep.subr.mxu0 0.0
  %421 = vmatpush1.msra.mxu0 %v23
  %422 = vmatprep.subr.mxu0 0.0
  %423 = vmatpush2.msra.mxu0 0.0
  %424 = vmatprep.subr.mxu0 0.0
  %425 = vmatpush2.msra.mxu0 0.0
  %426 = vmatprep.subr.mxu0 0.0
  %427 = vmatpush2.msra.mxu0 0.0
  %428 = vmatprep.subr.mxu0 0.0
  %429 = vmatpush2.msra.mxu0 0.0
  %430 = vmatprep.subr.mxu0 0.0
  %431 = vmatpush2.msra.mxu0 0.0
  %432 = vmatprep.subr.mxu0 0.0
  %433 = vmatpush2.msra.mxu0 0.0
  %434 = vmatprep.subr.mxu0 0.0
  %435 = vmatpush2.msra.mxu0 0.0
  %436 = vmatprep.subr.mxu0 0.0
  %437 = vmatpush2.msra.mxu0 0.0
  %438 = vmatprep.subr.mxu0 0.0
  %439 = vmatpush2.msra.mxu0 0.0
  %440 = vmatprep.subr.mxu0 0.0
  %441 = vmatpush2.msra.mxu0 0.0
  %442 = vmatprep.subr.mxu0 0.0
  %443 = vmatpush2.msra.mxu0 0.0
  %444 = vmatprep.subr.mxu0 0.0
  %445 = vmatpush2.msra.mxu0 0.0
  %446 = vmatprep.subr.mxu0 0.0
  %447 = vmatpush2.msra.mxu0 %v42
  %448 = vmatprep.subr.mxu0 0.0
  %449 = vmatpush2.msra.mxu0 %v41
  %450 = vmatprep.subr.mxu0 0.0
  %451 = vmatpush2.msra.mxu0 %v40
  %452 = vmatprep.subr.mxu0 0.0
  %453 = vmatpush2.msra.mxu0 %v39
  %454 = vmatprep.mubr.f32.mxu0 %v379
  %455 = vmatmul.mubr.f32.gmra.mxu0 %v370
  %v456 = vpop.f32.mrf.mxu0
  %v457 = vadd.f32 %v56, %v456
  %v458 = vpop.f32.mrf.mxu0
  %459 = vmatprep.mubr.f32.mxu0 %v382
  %460 = vmatmul.mubr.f32.gmra.mxu0 %v372
  %v461 = vpop.f32.mrf.mxu0
  %v462 = vadd.f32 %v56, %v461
  %v463 = vpop.f32.mrf.mxu0
  %464 = vmatprep.mubr.f32.mxu0 %v385
  %465 = vmatmul.mubr.f32.gmra.mxu0 %v374
  %v466 = vpop.f32.mrf.mxu0
  %v467 = vadd.f32 %v56, %v466
  %v468 = vpop.f32.mrf.mxu0
  %469 = vmatprep.mubr.f32.mxu0 %v388
  %470 = vmatmul.mubr.f32.gmra.mxu0 %v376
  %v471 = vpop.f32.mrf.mxu0
  %v472 = vadd.f32 %v56, %v471
  %v473 = vpop.f32.mrf.mxu0
  %474 = vdwg.mxu0
  %v475 = vmax.f32 %v352, %v457
  %v476 = vmax.f32 %v357, %v462
  %v477 = vmax.f32 %v362, %v467
  %v478 = vmax.f32 %v367, %v472
  %v479 = vmax.f32 %v261, %v475
  %v480 = vmax.f32 %v262, %v476
  %v481 = vmax.f32 %v263, %v477
  %v482 = vmax.f32 %v264, %v478
  %vm483 = vcmask 130048
  %484 = vst.msk [vmem:[%s6] sm:$0xff] %vm483, %v479
  %485 = vst.msk [vmem:[%s6 + $0x8] sm:$0xff] %vm483, %v480
  %486 = vst.msk [vmem:[%s6 + $0x10] sm:$0xff] %vm483, %v481
  %487 = vst.msk [vmem:[%s6 + $0x18] sm:$0xff] %vm483, %v482
  // Predicated region
  $region26: #{_lambda_.4} parent=0 // pred_check
    _
  $region27: #{_lambda_.4} parent=0 // pred_check_branch
    %489 = sbr.rel (0) target = $region29
  $region28: #{_lambda_.4} parent=0 // pred_region
    _
  $region29: #{_lambda_.4} parent=0 // pred_fallthru
    _
  // Predicated region
  $region30: #{_lambda_.4} parent=0 // pred_check
    _
  $region31: #{_lambda_.4} parent=0 // pred_check_branch
    %491 = sbr.rel (0) target = $region33
  $region32: #{_lambda_.4} parent=0 // pred_region
    _
  $region33: #{_lambda_.4} parent=0 // pred_fallthru
    _

// kernel: _lambda_.5
$region0: #{_lambda_.5}
  #allocation0 [shape = 'u32[]', space=smem, size = 0x4, offset = 0x4, fixed_abs, tag = 'smem constant byte address 0x4 - core index']
  #allocation1 [shape = 'u32[144,128]{1,0:T(1,128)}', space=vmem, size = 0x12000, scoped, tag = 'internal scratch']
  %s0 = inlined_call_operand.vmem [shape: f32[8,256], index: 0, kind: input, shape index: {}]
  %s1 = inlined_call_operand.vmem [shape: f32[256,120], index: 1, kind: input, shape index: {}]
  %s2 = inlined_call_operand.vmem [shape: f32[1,120], index: 2, kind: input, shape index: {}]
  %s3 = inlined_call_operand.vmem [shape: f32[120,84], index: 3, kind: input, shape index: {}]
  %s4 = inlined_call_operand.vmem [shape: f32[1,84], index: 4, kind: input, shape index: {}]
  %s5 = inlined_call_operand.vmem [shape: f32[84,10], index: 5, kind: input, shape index: {}]
  %s6 = inlined_call_operand.vmem [shape: f32[1,10], index: 6, kind: input, shape index: {}]
  %s7 = inlined_call_operand.vmem [shape: f32[8,10], index: 7, kind: output, shape index: {}]
  %s8 = sld [smem:[#allocation0]]
  $region38: #{_lambda_.5} parent=0
    _
  %s10 = ssub.s32 1, %s8
  %s11 = scalar_select 0, %s10, %s8
  // Predicated region
  $region2: #{_lambda_.5} parent=0 // pred_check
    _
  $region3: #{_lambda_.5} parent=0 // pred_check_branch
    %13 = sbr.rel (0) target = $region5
  $region4: #{_lambda_.5} parent=0 // pred_region
    _
  $region5: #{_lambda_.5} parent=0 // pred_fallthru
    _
  // Predicated region
  $region6: #{_lambda_.5} parent=0 // pred_check
    _
  $region7: #{_lambda_.5} parent=0 // pred_check_branch
    %15 = sbr.rel (0) target = $region9
  $region8: #{_lambda_.5} parent=0 // pred_region
    _
  $region9: #{_lambda_.5} parent=0 // pred_fallthru
    _
  // Predicated region
  $region10: #{_lambda_.5} parent=0 // pred_check
    _
  $region11: #{_lambda_.5} parent=0 // pred_check_branch
    %17 = sbr.rel (0) target = $region13
  $region12: #{_lambda_.5} parent=0 // pred_region
    _
  $region13: #{_lambda_.5} parent=0 // pred_fallthru
    _
  // Predicated region
  $region14: #{_lambda_.5} parent=0 // pred_check
    _
  $region15: #{_lambda_.5} parent=0 // pred_check_branch
    %19 = sbr.rel (0) target = $region17
  $region16: #{_lambda_.5} parent=0 // pred_region
    _
  $region17: #{_lambda_.5} parent=0 // pred_fallthru
    _
  // Predicated region
  $region18: #{_lambda_.5} parent=0 // pred_check
    _
  $region19: #{_lambda_.5} parent=0 // pred_check_branch
    %21 = sbr.rel (0) target = $region21
  $region20: #{_lambda_.5} parent=0 // pred_region
    _
  $region21: #{_lambda_.5} parent=0 // pred_fallthru
    _
  // Predicated region
  $region22: #{_lambda_.5} parent=0 // pred_check
    _
  $region23: #{_lambda_.5} parent=0 // pred_check_branch
    %23 = sbr.rel (0) target = $region25
  $region24: #{_lambda_.5} parent=0 // pred_region
    _
  $region25: #{_lambda_.5} parent=0 // pred_fallthru
    _
  // Predicated region
  $region26: #{_lambda_.5} parent=0 // pred_check
    _
  $region27: #{_lambda_.5} parent=0 // pred_check_branch
    %25 = sbr.rel (0) target = $region29
  $region28: #{_lambda_.5} parent=0 // pred_region
    _
  $region29: #{_lambda_.5} parent=0 // pred_fallthru
    _
  %v26 = vld [vmem:[%s0] sm:$0xff]
  %v27 = vld [vmem:[%s0 + $0x8] sm:$0xff]
  %v28 = vld [vmem:[%s1] sm:$0xff]
  %v29 = vld [vmem:[%s1 + $0x8] sm:$0xff]
  %v30 = vld [vmem:[%s1 + $0x10] sm:$0xff]
  %v31 = vld [vmem:[%s1 + $0x18] sm:$0xff]
  %v32 = vld [vmem:[%s1 + $0x20] sm:$0xff]
  %v33 = vld [vmem:[%s1 + $0x28] sm:$0xff]
  %v34 = vld [vmem:[%s1 + $0x30] sm:$0xff]
  %v35 = vld [vmem:[%s1 + $0x38] sm:$0xff]
  %v36 = vld [vmem:[%s1 + $0x40] sm:$0xff]
  %v37 = vld [vmem:[%s1 + $0x48] sm:$0xff]
  %v38 = vld [vmem:[%s1 + $0x50] sm:$0xff]
  %v39 = vld [vmem:[%s1 + $0x58] sm:$0xff]
  %v40 = vld [vmem:[%s1 + $0x60] sm:$0xff]
  %v41 = vld [vmem:[%s1 + $0x68] sm:$0xff]
  %v42 = vld [vmem:[%s1 + $0x70] sm:$0xff]
  %v43 = vld [vmem:[%s1 + $0x78] sm:$0xff]
  %v44 = vld [vmem:[%s1 + $0x80] sm:$0xff]
  %v45 = vld [vmem:[%s1 + $0x88] sm:$0xff]
  %v46 = vld [vmem:[%s1 + $0x90] sm:$0xff]
  %v47 = vld [vmem:[%s1 + $0x98] sm:$0xff]
  %v48 = vld [vmem:[%s1 + $0xa0] sm:$0xff]
  %v49 = vld [vmem:[%s1 + $0xa8] sm:$0xff]
  %v50 = vld [vmem:[%s1 + $0xb0] sm:$0xff]
  %v51 = vld [vmem:[%s1 + $0xb8] sm:$0xff]
  %v52 = vld [vmem:[%s1 + $0xc0] sm:$0xff]
  %v53 = vld [vmem:[%s1 + $0xc8] sm:$0xff]
  %v54 = vld [vmem:[%s1 + $0xd0] sm:$0xff]
  %v55 = vld [vmem:[%s1 + $0xd8] sm:$0xff]
  %v56 = vld [vmem:[%s1 + $0xe0] sm:$0xff]
  %v57 = vld [vmem:[%s1 + $0xe8] sm:$0xff]
  %v58 = vld [vmem:[%s1 + $0xf0] sm:$0xff]
  %v59 = vld [vmem:[%s1 + $0xf8] sm:$0xff]
  %v60 = vld [vmem:[%s2] sm:$0x1]
  %v62 = vlaneseq
  %v63 = vshrl.u32 %v62, 7
  %v64 = vsub.s32 0, %v63
  %v65 = vrot.slane %v60, %v64
  %67 = vmatprep.subr.mxu0 0.0
  %68 = vmatpush1.msra.mxu0 %v43
  %69 = vmatprep.subr.mxu0 0.0
  %70 = vmatpush1.msra.mxu0 %v42
  %71 = vmatprep.subr.mxu0 0.0
  %72 = vmatpush1.msra.mxu0 %v41
  %73 = vmatprep.subr.mxu0 0.0
  %74 = vmatpush1.msra.mxu0 %v40
  %75 = vmatprep.subr.mxu0 0.0
  %76 = vmatpush1.msra.mxu0 %v39
  %77 = vmatprep.subr.mxu0 0.0
  %78 = vmatpush1.msra.mxu0 %v38
  %79 = vmatprep.subr.mxu0 0.0
  %80 = vmatpush1.msra.mxu0 %v37
  %81 = vmatprep.subr.mxu0 0.0
  %82 = vmatpush1.msra.mxu0 %v36
  %83 = vmatprep.subr.mxu0 0.0
  %84 = vmatpush1.msra.mxu0 %v35
  %85 = vmatprep.subr.mxu0 0.0
  %86 = vmatpush1.msra.mxu0 %v34
  %87 = vmatprep.subr.mxu0 0.0
  %88 = vmatpush1.msra.mxu0 %v33
  %89 = vmatprep.subr.mxu0 0.0
  %90 = vmatpush1.msra.mxu0 %v32
  %91 = vmatprep.subr.mxu0 0.0
  %92 = vmatpush1.msra.mxu0 %v31
  %93 = vmatprep.subr.mxu0 0.0
  %94 = vmatpush1.msra.mxu0 %v30
  %95 = vmatprep.subr.mxu0 0.0
  %96 = vmatpush1.msra.mxu0 %v29
  %97 = vmatprep.subr.mxu0 0.0
  %98 = vmatpush1.msra.mxu0 %v28
  %99 = vmatprep.subr.mxu0 0.0
  %100 = vmatpush2.msra.mxu0 %v59
  %101 = vmatprep.subr.mxu0 0.0
  %102 = vmatpush2.msra.mxu0 %v58
  %103 = vmatprep.subr.mxu0 0.0
  %104 = vmatpush2.msra.mxu0 %v57
  %105 = vmatprep.subr.mxu0 0.0
  %106 = vmatpush2.msra.mxu0 %v56
  %107 = vmatprep.subr.mxu0 0.0
  %108 = vmatpush2.msra.mxu0 %v55
  %109 = vmatprep.subr.mxu0 0.0
  %110 = vmatpush2.msra.mxu0 %v54
  %111 = vmatprep.subr.mxu0 0.0
  %112 = vmatpush2.msra.mxu0 %v53
  %113 = vmatprep.subr.mxu0 0.0
  %114 = vmatpush2.msra.mxu0 %v52
  %115 = vmatprep.subr.mxu0 0.0
  %116 = vmatpush2.msra.mxu0 %v51
  %117 = vmatprep.subr.mxu0 0.0
  %118 = vmatpush2.msra.mxu0 %v50
  %119 = vmatprep.subr.mxu0 0.0
  %120 = vmatpush2.msra.mxu0 %v49
  %121 = vmatprep.subr.mxu0 0.0
  %122 = vmatpush2.msra.mxu0 %v48
  %123 = vmatprep.subr.mxu0 0.0
  %124 = vmatpush2.msra.mxu0 %v47
  %125 = vmatprep.subr.mxu0 0.0
  %126 = vmatpush2.msra.mxu0 %v46
  %127 = vmatprep.subr.mxu0 0.0
  %128 = vmatpush2.msra.mxu0 %v45
  %129 = vmatprep.subr.mxu0 0.0
  %130 = vmatpush2.msra.mxu0 %v44
  %131 = vmatprep.mubr.f32.mxu0 %v27
  %132 = vmatmul.mubr.f32.gmra.mxu0 %v26
  %v133 = vpop.f32.mrf.mxu0
  %v134 = vadd.f32 %v65, %v133
  %v135 = vpop.f32.mrf.mxu0
  %136 = vdwg.mxu0
  %v137 = vmax.f32 %v134, 0.0
  %v138 = vld [vmem:[%s3] sm:$0xff]
  %v139 = vld [vmem:[%s3 + $0x8] sm:$0xff]
  %v140 = vld [vmem:[%s3 + $0x10] sm:$0xff]
  %v141 = vld [vmem:[%s3 + $0x18] sm:$0xff]
  %v142 = vld [vmem:[%s3 + $0x20] sm:$0xff]
  %v143 = vld [vmem:[%s3 + $0x28] sm:$0xff]
  %v144 = vld [vmem:[%s3 + $0x30] sm:$0xff]
  %v145 = vld [vmem:[%s3 + $0x38] sm:$0xff]
  %v146 = vld [vmem:[%s3 + $0x40] sm:$0xff]
  %v147 = vld [vmem:[%s3 + $0x48] sm:$0xff]
  %v148 = vld [vmem:[%s3 + $0x50] sm:$0xff]
  %v149 = vld [vmem:[%s3 + $0x58] sm:$0xff]
  %v150 = vld [vmem:[%s3 + $0x60] sm:$0xff]
  %v151 = vld [vmem:[%s3 + $0x68] sm:$0xff]
  %v152 = vld [vmem:[%s3 + $0x70] sm:$0xff]
  %v153 = vld [vmem:[%s4] sm:$0x1]
  %v155 = vlaneseq
  %v156 = vshrl.u32 %v155, 7
  %v157 = vsub.s32 0, %v156
  %v158 = vrot.slane %v153, %v157
  %vm160 = vcmask 982016
  %v162 = vsel %vm160, %v137, 0
  %164 = vmatprep.subr.mxu0 0.0
  %165 = vmatpush1.msra.mxu0 0.0
  %166 = vmatprep.subr.mxu0 0.0
  %167 = vmatpush1.msra.mxu0 %v152
  %168 = vmatprep.subr.mxu0 0.0
  %169 = vmatpush1.msra.mxu0 %v151
  %170 = vmatprep.subr.mxu0 0.0
  %171 = vmatpush1.msra.mxu0 %v150
  %172 = vmatprep.subr.mxu0 0.0
  %173 = vmatpush1.msra.mxu0 %v149
  %174 = vmatprep.subr.mxu0 0.0
  %175 = vmatpush1.msra.mxu0 %v148
  %176 = vmatprep.subr.mxu0 0.0
  %177 = vmatpush1.msra.mxu0 %v147
  %178 = vmatprep.subr.mxu0 0.0
  %179 = vmatpush1.msra.mxu0 %v146
  %180 = vmatprep.subr.mxu0 0.0
  %181 = vmatpush1.msra.mxu0 %v145
  %182 = vmatprep.subr.mxu0 0.0
  %183 = vmatpush1.msra.mxu0 %v144
  %184 = vmatprep.subr.mxu0 0.0
  %185 = vmatpush1.msra.mxu0 %v143
  %186 = vmatprep.subr.mxu0 0.0
  %187 = vmatpush1.msra.mxu0 %v142
  %188 = vmatprep.subr.mxu0 0.0
  %189 = vmatpush1.msra.mxu0 %v141
  %190 = vmatprep.subr.mxu0 0.0
  %191 = vmatpush1.msra.mxu0 %v140
  %192 = vmatprep.subr.mxu0 0.0
  %193 = vmatpush1.msra.mxu0 %v139
  %194 = vmatprep.subr.mxu0 0.0
  %195 = vmatpush1.msra.mxu0 %v138
  %196 = vmatprep.subr.mxu0 0.0
  %197 = vmatpush2.msra.mxu0 0.0
  %198 = vmatprep.subr.mxu0 0.0
  %199 = vmatpush2.msra.mxu0 0.0
  %200 = vmatprep.subr.mxu0 0.0
  %201 = vmatpush2.msra.mxu0 0.0
  %202 = vmatprep.subr.mxu0 0.0
  %203 = vmatpush2.msra.mxu0 0.0
  %204 = vmatprep.subr.mxu0 0.0
  %205 = vmatpush2.msra.mxu0 0.0
  %206 = vmatprep.subr.mxu0 0.0
  %207 = vmatpush2.msra.mxu0 0.0
  %208 = vmatprep.subr.mxu0 0.0
  %209 = vmatpush2.msra.mxu0 0.0
  %210 = vmatprep.subr.mxu0 0.0
  %211 = vmatpush2.msra.mxu0 0.0
  %212 = vmatprep.subr.mxu0 0.0
  %213 = vmatpush2.msra.mxu0 0.0
  %214 = vmatprep.subr.mxu0 0.0
  %215 = vmatpush2.msra.mxu0 0.0
  %216 = vmatprep.subr.mxu0 0.0
  %217 = vmatpush2.msra.mxu0 0.0
  %218 = vmatprep.subr.mxu0 0.0
  %219 = vmatpush2.msra.mxu0 0.0
  %220 = vmatprep.subr.mxu0 0.0
  %221 = vmatpush2.msra.mxu0 0.0
  %222 = vmatprep.subr.mxu0 0.0
  %223 = vmatpush2.msra.mxu0 0.0
  %224 = vmatprep.subr.mxu0 0.0
  %225 = vmatpush2.msra.mxu0 0.0
  %226 = vmatprep.subr.mxu0 0.0
  %227 = vmatpush2.msra.mxu0 0.0
  %228 = vmatprep.mubr.f32.mxu0 0.0
  %229 = vmatmul.mubr.f32.gmra.mxu0 %v162
  %v230 = vpop.f32.mrf.mxu0
  %v231 = vadd.f32 %v158, %v230
  %v232 = vpop.f32.mrf.mxu0
  %233 = vdwg.mxu0
  %v234 = vmax.f32 %v231, 0.0
  %v235 = vld [vmem:[%s5] sm:$0xff]
  %v236 = vld [vmem:[%s5 + $0x8] sm:$0xff]
  %v237 = vld [vmem:[%s5 + $0x10] sm:$0xff]
  %v238 = vld [vmem:[%s5 + $0x18] sm:$0xff]
  %v239 = vld [vmem:[%s5 + $0x20] sm:$0xff]
  %v240 = vld [vmem:[%s5 + $0x28] sm:$0xff]
  %v241 = vld [vmem:[%s5 + $0x30] sm:$0xff]
  %v242 = vld [vmem:[%s5 + $0x38] sm:$0xff]
  %v243 = vld [vmem:[%s5 + $0x40] sm:$0xff]
  %v244 = vld [vmem:[%s5 + $0x48] sm:$0xff]
  %v245 = vld [vmem:[%s5 + $0x50] sm:$0xf]
  %v246 = vld [vmem:[%s6] sm:$0x1]
  %v248 = vlaneseq
  %v249 = vshrl.u32 %v248, 7
  %v250 = vsub.s32 0, %v249
  %v251 = vrot.slane %v246, %v250
  %vm253 = vcmask 687104
  %v255 = vsel %vm253, %v234, 0
  %vm257 = vcmask 1043456
  %v259 = vsel %vm257, %v245, 0
  %261 = vmatprep.subr.mxu0 0.0
  %262 = vmatpush1.msra.mxu0 0.0
  %263 = vmatprep.subr.mxu0 0.0
  %264 = vmatpush1.msra.mxu0 0.0
  %265 = vmatprep.subr.mxu0 0.0
  %266 = vmatpush1.msra.mxu0 0.0
  %267 = vmatprep.subr.mxu0 0.0
  %268 = vmatpush1.msra.mxu0 0.0
  %269 = vmatprep.subr.mxu0 0.0
  %270 = vmatpush1.msra.mxu0 0.0
  %271 = vmatprep.subr.mxu0 0.0
  %272 = vmatpush1.msra.mxu0 %v259
  %273 = vmatprep.subr.mxu0 0.0
  %274 = vmatpush1.msra.mxu0 %v244
  %275 = vmatprep.subr.mxu0 0.0
  %276 = vmatpush1.msra.mxu0 %v243
  %277 = vmatprep.subr.mxu0 0.0
  %278 = vmatpush1.msra.mxu0 %v242
  %279 = vmatprep.subr.mxu0 0.0
  %280 = vmatpush1.msra.mxu0 %v241
  %281 = vmatprep.subr.mxu0 0.0
  %282 = vmatpush1.msra.mxu0 %v240
  %283 = vmatprep.subr.mxu0 0.0
  %284 = vmatpush1.msra.mxu0 %v239
  %285 = vmatprep.subr.mxu0 0.0
  %286 = vmatpush1.msra.mxu0 %v238
  %287 = vmatprep.subr.mxu0 0.0
  %288 = vmatpush1.msra.mxu0 %v237
  %289 = vmatprep.subr.mxu0 0.0
  %290 = vmatpush1.msra.mxu0 %v236
  %291 = vmatprep.subr.mxu0 0.0
  %292 = vmatpush1.msra.mxu0 %v235
  %293 = vmatprep.subr.mxu0 0.0
  %294 = vmatpush2.msra.mxu0 0.0
  %295 = vmatprep.subr.mxu0 0.0
  %296 = vmatpush2.msra.mxu0 0.0
  %297 = vmatprep.subr.mxu0 0.0
  %298 = vmatpush2.msra.mxu0 0.0
  %299 = vmatprep.subr.mxu0 0.0
  %300 = vmatpush2.msra.mxu0 0.0
  %301 = vmatprep.subr.mxu0 0.0
  %302 = vmatpush2.msra.mxu0 0.0
  %303 = vmatprep.subr.mxu0 0.0
  %304 = vmatpush2.msra.mxu0 0.0
  %305 = vmatprep.subr.mxu0 0.0
  %306 = vmatpush2.msra.mxu0 0.0
  %307 = vmatprep.subr.mxu0 0.0
  %308 = vmatpush2.msra.mxu0 0.0
  %309 = vmatprep.subr.mxu0 0.0
  %310 = vmatpush2.msra.mxu0 0.0
  %311 = vmatprep.subr.mxu0 0.0
  %312 = vmatpush2.msra.mxu0 0.0
  %313 = vmatprep.subr.mxu0 0.0
  %314 = vmatpush2.msra.mxu0 0.0
  %315 = vmatprep.subr.mxu0 0.0
  %316 = vmatpush2.msra.mxu0 0.0
  %317 = vmatprep.subr.mxu0 0.0
  %318 = vmatpush2.msra.mxu0 0.0
  %319 = vmatprep.subr.mxu0 0.0
  %320 = vmatpush2.msra.mxu0 0.0
  %321 = vmatprep.subr.mxu0 0.0
  %322 = vmatpush2.msra.mxu0 0.0
  %323 = vmatprep.subr.mxu0 0.0
  %324 = vmatpush2.msra.mxu0 0.0
  %325 = vmatprep.mubr.f32.mxu0 0.0
  %326 = vmatmul.mubr.f32.gmra.mxu0 %v255
  %v327 = vpop.f32.mrf.mxu0
  %v328 = vadd.f32 %v251, %v327
  %v329 = vpop.f32.mrf.mxu0
  %330 = vdwg.mxu0
  %vm331 = vcmask 80896
  %332 = vst.msk [vmem:[%s7] sm:$0xff] %vm331, %v328
  // Predicated region
  $region30: #{_lambda_.5} parent=0 // pred_check
    _
  $region31: #{_lambda_.5} parent=0 // pred_check_branch
    %334 = sbr.rel (0) target = $region33
  $region32: #{_lambda_.5} parent=0 // pred_region
    _
  $region33: #{_lambda_.5} parent=0 // pred_fallthru
    _
  // Predicated region
  $region34: #{_lambda_.5} parent=0 // pred_check
    _
  $region35: #{_lambda_.5} parent=0 // pred_check_branch
    %336 = sbr.rel (0) target = $region37
  $region36: #{_lambda_.5} parent=0 // pred_region
    _
  $region37: #{_lambda_.5} parent=0 // pred_fallthru
    _

</llo_original>
